<compile_context>
chip_gen: v7x
topology: tpu7x:2x2x1
jax: 0.10.0
libtpu: 0.0.40
codegen_flags: <defaults>
</compile_context>

<pallas_src>
import jax
import jax.numpy as jnp
from jax.experimental import pallas as pl
from jax.experimental.pallas import tpu as pltpu

D_IN = 28 * 28      # 784
D_H = 512
D_OUT = 10
D_OUT_PAD = 128     # lane-dense output width (avoids masked 10-lane stores)


def _round_up(x, m):
    return (x + m - 1) // m * m


def _cdiv(a, b):
    return (a + b - 1) // b


def mlp_kernel(x_ref, w1_ref, b1_ref, w2_ref, b2_ref, w3_ref, b3_ref,
               o_ref, h1_ref, h2_ref):
    """Whole 3-layer MLP on one batch tile.  Weights/biases are grid-invariant
    VMEM blocks (constant index_maps -> no per-step weight DMA).  Activations
    live in VMEM scratch in the compute dtype; accumulation is always f32."""
    cd = w1_ref.dtype
    x = x_ref[...].astype(cd)   # f32 -> compute dtype in-kernel (no wrapper HBM pass)

    h1 = jnp.dot(x, w1_ref[...], preferred_element_type=jnp.float32) + b1_ref[...]
    h1_ref[...] = jnp.maximum(h1, 0.0).astype(h1_ref.dtype)

    h2 = jnp.dot(h1_ref[...], w2_ref[...], preferred_element_type=jnp.float32) + b2_ref[...]
    h2_ref[...] = jnp.maximum(h2, 0.0).astype(h2_ref.dtype)

    h3 = jnp.dot(h2_ref[...], w3_ref[...], preferred_element_type=jnp.float32) + b3_ref[...]
    o_ref[...] = jnp.maximum(h3, 0.0).astype(o_ref.dtype)


def prepare_params(params, compute_dtype=jnp.float32):
    """One-time layout/dtype prep (hoisted out of the per-call path).
    All padding is zeros and is sliced off later -> numerically exact."""
    w1, b1, w2, b2, w3, b3 = params
    w1p = w1.astype(compute_dtype)
    w2p = w2.astype(compute_dtype)
    w3p = jnp.pad(w3, ((0, 0), (0, D_OUT_PAD - D_OUT))).astype(compute_dtype)
    b1p = b1.reshape(1, D_H).astype(jnp.float32)
    b2p = b2.reshape(1, D_H).astype(jnp.float32)
    b3p = jnp.pad(b3.reshape(1, D_OUT),
                  ((0, 0), (0, D_OUT_PAD - D_OUT))).astype(jnp.float32)
    return (w1p, b1p, w2p, b2p, w3p, b3p)


def neural_network_forward(x_nchw, prepared_params, *, tb=512, min_tiles=2):
    """x_nchw: (B, 1, 28, 28) float32.  Returns logits (B, 10) float32.

    tb: max batch-tile rows (>=512 amortizes per-step grid overhead; use 1024
        with bf16 weights on v6e/v7x).
    min_tiles: keep >=2 batch tiles when possible so v7x's two TensorCores
        both get work via the "parallel" grid axis (harmless on v5e/v6e).
    """
    w1p, b1p, w2p, b2p, w3p, b3p = prepared_params
    compute_dtype = w1p.dtype
    B = x_nchw.shape[0]

    # nn.Flatten(); x stays f32 in HBM, cast happens inside the kernel.
    x = x_nchw.reshape(B, D_IN)
    if x.dtype != jnp.float32:
        x = x.astype(jnp.float32)

    # Ragged-batch tiling: <= ~8 rows of zero padding per tile.
    n_tiles = max(_cdiv(B, tb), min(min_tiles, _cdiv(B, 8)), 1)
    tb_eff = _round_up(_cdiv(B, n_tiles), 8)
    n_tiles = _cdiv(B, tb_eff)
    B_pad = n_tiles * tb_eff
    if B_pad != B:
        x = jnp.pad(x, ((0, B_pad - B), (0, 0)))

    flops = 2 * B_pad * (D_IN * D_H + D_H * D_H + D_H * D_OUT_PAD)
    w_bytes = sum(int(a.size) * a.dtype.itemsize
                  for a in (w1p, b1p, w2p, b2p, w3p, b3p))
    bytes_accessed = int(x.size) * x.dtype.itemsize + w_bytes + B_pad * D_OUT_PAD * 4

    out = pl.pallas_call(
        mlp_kernel,
        out_shape=jax.ShapeDtypeStruct((B_pad, D_OUT_PAD), jnp.float32),
        grid_spec=pltpu.PrefetchScalarGridSpec(
            num_scalar_prefetch=0,
            grid=(n_tiles,),
            in_specs=[
                pl.BlockSpec((tb_eff, D_IN), lambda i: (i, 0)),    # x tile (784 = full dim)
                pl.BlockSpec((D_IN, D_H), lambda i: (0, 0)),       # W1 (VMEM-resident)
                pl.BlockSpec((1, D_H), lambda i: (0, 0)),          # b1
                pl.BlockSpec((D_H, D_H), lambda i: (0, 0)),        # W2
                pl.BlockSpec((1, D_H), lambda i: (0, 0)),          # b2
                pl.BlockSpec((D_H, D_OUT_PAD), lambda i: (0, 0)),  # W3 (lane-padded)
                pl.BlockSpec((1, D_OUT_PAD), lambda i: (0, 0)),    # b3 (lane-padded)
            ],
            out_specs=pl.BlockSpec((tb_eff, D_OUT_PAD), lambda i: (i, 0)),
            scratch_shapes=[
                pltpu.VMEM((tb_eff, D_H), compute_dtype),  # h1
                pltpu.VMEM((tb_eff, D_H), compute_dtype),  # h2
            ],
        ),
        compiler_params=pltpu.CompilerParams(
            dimension_semantics=("parallel",),
            vmem_limit_bytes=32 * 1024 * 1024,
        ),
        cost_estimate=pl.CostEstimate(
            flops=flops, transcendentals=0, bytes_accessed=bytes_accessed),
    )(x, w1p, b1p, w2p, b2p, w3p, b3p)

    return out[:B, :D_OUT]


def init_params(key):
    """Deterministic init matching the PyTorch layer shapes.
    Weights are stored (in, out) so the kernel does y = x @ W + b."""
    k1, k2, k3, k4, k5, k6 = jax.random.split(key, 6)

    def lin(kw, kb, fan_in, fan_out):
        bound = 1.0 / jnp.sqrt(fan_in)
        w = jax.random.uniform(kw, (fan_in, fan_out), jnp.float32, -bound, bound)
        b = jax.random.uniform(kb, (1, fan_out), jnp.float32, -bound, bound)
        return w, b

    w1, b1 = lin(k1, k2, D_IN, D_H)
    w2, b2 = lin(k3, k4, D_H, D_H)
    w3, b3 = lin(k5, k6, D_H, D_OUT)
    return (w1, b1, w2, b2, w3, b3)


def reference_forward(x_nchw, params):
    w1, b1, w2, b2, w3, b3 = params
    x = x_nchw.reshape(x_nchw.shape[0], -1)
    h1 = jnp.maximum(x @ w1 + b1, 0.0)
    h2 = jnp.maximum(h1 @ w2 + b2, 0.0)
    return jnp.maximum(h2 @ w3 + b3, 0.0)


if __name__ == "__main__":
    key = jax.random.PRNGKey(0)
    kx, kp = jax.random.split(key)

    B = 12  # deliberately not a multiple of 8: exercises ragged tiling + 2-tile grid
    x = jax.random.normal(kx, (B, 1, 28, 28), dtype=jnp.float32)  # NCHW like PyTorch
    params = init_params(kp)
    ref = reference_forward(x, params)

    # f32 path (exact vs reference).
    p_f32 = prepare_params(params, jnp.float32)
    logits = jax.block_until_ready(neural_network_forward(x, p_f32))
    assert logits.shape == (B, D_OUT)
    assert jnp.allclose(logits, ref, atol=1e-4, rtol=1e-4), "f32 mismatch vs JAX reference"

    # bf16 weight/activation path (recommended on all gens: only the MXU sees
    # bf16; bias-add/ReLU/accumulation stay f32).
    p_bf16 = prepare_params(params, jnp.bfloat16)
    logits_bf16 = jax.block_until_ready(
        neural_network_forward(x, p_bf16, tb=1024))
    assert logits_bf16.shape == (B, D_OUT)
    assert jnp.allclose(logits_bf16, ref, atol=1e-1, rtol=1e-1), "bf16 mismatch vs JAX reference"

    print("KERNEL_OK")
</pallas_src>

<mosaic_0001>
module attributes {stable_mosaic.version = 11 : i64} {
  func.func @mlp_kernel(%arg0: i32, %arg1: memref<8x784xf32, #tpu.memory_space<vmem>>, %arg2: memref<784x512xf32, #tpu.memory_space<vmem>>, %arg3: memref<1x512xf32, #tpu.memory_space<vmem>>, %arg4: memref<512x512xf32, #tpu.memory_space<vmem>>, %arg5: memref<1x512xf32, #tpu.memory_space<vmem>>, %arg6: memref<512x128xf32, #tpu.memory_space<vmem>>, %arg7: memref<1x128xf32, #tpu.memory_space<vmem>>, %arg8: memref<8x128xf32, #tpu.memory_space<vmem>>, %arg9: memref<8x512xf32, #tpu.memory_space<vmem>>, %arg10: memref<8x512xf32, #tpu.memory_space<vmem>>) attributes {dimension_semantics = [#tpu.dimension_semantics<parallel>], iteration_bounds = array<i64: 2>, scalar_prefetch = 0 : i64, scratch_operands = 2 : i64, tpu.core_type = #tpu.core_type<tc>, window_params = [{transform_indices = @transform_0, window_bounds = array<i64: 8, 784>}, {pipeline_mode = #tpu.pipeline_mode<synchronous>, transform_indices = @transform_1, window_bounds = array<i64: 784, 512>}, {pipeline_mode = #tpu.pipeline_mode<synchronous>, transform_indices = @transform_2, window_bounds = array<i64: 1, 512>}, {pipeline_mode = #tpu.pipeline_mode<synchronous>, transform_indices = @transform_3, window_bounds = array<i64: 512, 512>}, {pipeline_mode = #tpu.pipeline_mode<synchronous>, transform_indices = @transform_4, window_bounds = array<i64: 1, 512>}, {pipeline_mode = #tpu.pipeline_mode<synchronous>, transform_indices = @transform_5, window_bounds = array<i64: 512, 128>}, {pipeline_mode = #tpu.pipeline_mode<synchronous>, transform_indices = @transform_6, window_bounds = array<i64: 1, 128>}, {transform_indices = @transform_7, window_bounds = array<i64: 8, 128>}]} {
    %c0 = arith.constant 0 : index
    %c0_0 = arith.constant 0 : index
    %0 = vector.load %arg1[%c0, %c0_0] : memref<8x784xf32, #tpu.memory_space<vmem>>, vector<8x784xf32>
    %c0_1 = arith.constant 0 : index
    %c0_2 = arith.constant 0 : index
    %1 = vector.load %arg2[%c0_1, %c0_2] : memref<784x512xf32, #tpu.memory_space<vmem>>, vector<784x512xf32>
    %cst = arith.constant dense<0.000000e+00> : vector<8x512xf32>
    %2 = tpu.matmul %0, %1, %cst {dimension_numbers = #tpu.dot_dimension_numbers<[1], [0], [0], [1], [0, 0, 1, 1], [], []>} : vector<8x784xf32>, vector<784x512xf32>, vector<8x512xf32> -> vector<8x512xf32>
    %c0_3 = arith.constant 0 : index
    %c0_4 = arith.constant 0 : index
    %3 = vector.load %arg3[%c0_3, %c0_4] : memref<1x512xf32, #tpu.memory_space<vmem>>, vector<1x512xf32>
    %4 = vector.broadcast %3 : vector<1x512xf32> to vector<8x512xf32>
    %5 = arith.addf %2, %4 : vector<8x512xf32>
    %cst_5 = arith.constant 0.000000e+00 : f32
    %6 = vector.broadcast %cst_5 : f32 to vector<8x512xf32>
    %7 = arith.maximumf %5, %6 : vector<8x512xf32>
    %c0_6 = arith.constant 0 : index
    %c0_7 = arith.constant 0 : index
    %8 = vector.load %arg9[%c0_6, %c0_7] : memref<8x512xf32, #tpu.memory_space<vmem>>, vector<8x512xf32>
    tpu.vector_store %arg9[%c0_6, %c0_7], %7 {strides = array<i32>} : memref<8x512xf32, #tpu.memory_space<vmem>>, vector<8x512xf32>,
    %c0_8 = arith.constant 0 : index
    %c0_9 = arith.constant 0 : index
    %9 = vector.load %arg9[%c0_8, %c0_9] : memref<8x512xf32, #tpu.memory_space<vmem>>, vector<8x512xf32>
    %c0_10 = arith.constant 0 : index
    %c0_11 = arith.constant 0 : index
    %10 = vector.load %arg4[%c0_10, %c0_11] : memref<512x512xf32, #tpu.memory_space<vmem>>, vector<512x512xf32>
    %cst_12 = arith.constant dense<0.000000e+00> : vector<8x512xf32>
    %11 = tpu.matmul %9, %10, %cst_12 {dimension_numbers = #tpu.dot_dimension_numbers<[1], [0], [0], [1], [0, 0, 1, 1], [], []>} : vector<8x512xf32>, vector<512x512xf32>, vector<8x512xf32> -> vector<8x512xf32>
    %c0_13 = arith.constant 0 : index
    %c0_14 = arith.constant 0 : index
    %12 = vector.load %arg5[%c0_13, %c0_14] : memref<1x512xf32, #tpu.memory_space<vmem>>, vector<1x512xf32>
    %13 = vector.broadcast %12 : vector<1x512xf32> to vector<8x512xf32>
    %14 = arith.addf %11, %13 : vector<8x512xf32>
    %cst_15 = arith.constant 0.000000e+00 : f32
    %15 = vector.broadcast %cst_15 : f32 to vector<8x512xf32>
    %16 = arith.maximumf %14, %15 : vector<8x512xf32>
    %c0_16 = arith.constant 0 : index
    %c0_17 = arith.constant 0 : index
    %17 = vector.load %arg10[%c0_16, %c0_17] : memref<8x512xf32, #tpu.memory_space<vmem>>, vector<8x512xf32>
    tpu.vector_store %arg10[%c0_16, %c0_17], %16 {strides = array<i32>} : memref<8x512xf32, #tpu.memory_space<vmem>>, vector<8x512xf32>,
    %c0_18 = arith.constant 0 : index
    %c0_19 = arith.constant 0 : index
    %18 = vector.load %arg10[%c0_18, %c0_19] : memref<8x512xf32, #tpu.memory_space<vmem>>, vector<8x512xf32>
    %c0_20 = arith.constant 0 : index
    %c0_21 = arith.constant 0 : index
    %19 = vector.load %arg6[%c0_20, %c0_21] : memref<512x128xf32, #tpu.memory_space<vmem>>, vector<512x128xf32>
    %cst_22 = arith.constant dense<0.000000e+00> : vector<8x128xf32>
    %20 = tpu.matmul %18, %19, %cst_22 {dimension_numbers = #tpu.dot_dimension_numbers<[1], [0], [0], [1], [0, 0, 1, 1], [], []>} : vector<8x512xf32>, vector<512x128xf32>, vector<8x128xf32> -> vector<8x128xf32>
    %c0_23 = arith.constant 0 : index
    %c0_24 = arith.constant 0 : index
    %21 = vector.load %arg7[%c0_23, %c0_24] : memref<1x128xf32, #tpu.memory_space<vmem>>, vector<1x128xf32>
    %22 = vector.broadcast %21 : vector<1x128xf32> to vector<8x128xf32>
    %23 = arith.addf %20, %22 : vector<8x128xf32>
    %cst_25 = arith.constant 0.000000e+00 : f32
    %24 = vector.broadcast %cst_25 : f32 to vector<8x128xf32>
    %25 = arith.maximumf %23, %24 : vector<8x128xf32>
    %c0_26 = arith.constant 0 : index
    %c0_27 = arith.constant 0 : index
    %26 = vector.load %arg8[%c0_26, %c0_27] : memref<8x128xf32, #tpu.memory_space<vmem>>, vector<8x128xf32>
    tpu.vector_store %arg8[%c0_26, %c0_27], %25 {strides = array<i32>} : memref<8x128xf32, #tpu.memory_space<vmem>>, vector<8x128xf32>,
    return
  }
  func.func @transform_0(%arg0: i32) -> (i32, i32) {
    %c0_i32 = arith.constant 0 : i32
    %c0_i32_0 = arith.constant 0 : i32
    return %arg0, %c0_i32 : i32, i32
  }
  func.func @transform_1(%arg0: i32) -> (i32, i32) {
    %c0_i32 = arith.constant 0 : i32
    %c0_i32_0 = arith.constant 0 : i32
    %c0_i32_1 = arith.constant 0 : i32
    return %c0_i32, %c0_i32_0 : i32, i32
  }
  func.func @transform_2(%arg0: i32) -> (i32, i32) {
    %c0_i32 = arith.constant 0 : i32
    %c0_i32_0 = arith.constant 0 : i32
    %c0_i32_1 = arith.constant 0 : i32
    return %c0_i32, %c0_i32_0 : i32, i32
  }
  func.func @transform_3(%arg0: i32) -> (i32, i32) {
    %c0_i32 = arith.constant 0 : i32
    %c0_i32_0 = arith.constant 0 : i32
    %c0_i32_1 = arith.constant 0 : i32
    return %c0_i32, %c0_i32_0 : i32, i32
  }
  func.func @transform_4(%arg0: i32) -> (i32, i32) {
    %c0_i32 = arith.constant 0 : i32
    %c0_i32_0 = arith.constant 0 : i32
    %c0_i32_1 = arith.constant 0 : i32
    return %c0_i32, %c0_i32_0 : i32, i32
  }
  func.func @transform_5(%arg0: i32) -> (i32, i32) {
    %c0_i32 = arith.constant 0 : i32
    %c0_i32_0 = arith.constant 0 : i32
    %c0_i32_1 = arith.constant 0 : i32
    return %c0_i32, %c0_i32_0 : i32, i32
  }
  func.func @transform_6(%arg0: i32) -> (i32, i32) {
    %c0_i32 = arith.constant 0 : i32
    %c0_i32_0 = arith.constant 0 : i32
    %c0_i32_1 = arith.constant 0 : i32
    return %c0_i32, %c0_i32_0 : i32, i32
  }
  func.func @transform_7(%arg0: i32) -> (i32, i32) {
    %c0_i32 = arith.constant 0 : i32
    %c0_i32_0 = arith.constant 0 : i32
    return %arg0, %c0_i32 : i32, i32
  }
}

</mosaic_0001>

<llo_original>
// kernel: tpu_custom_call.1
$region0: #{tpu_custom_call.1}
  #allocation0 [shape = 'u32[]', space=smem, size = 0x4, offset = 0x4, fixed_abs, tag = 'smem constant byte address 0x4 - core index']
  #allocation1 [shape = 'u32[144,128]{1,0:T(1,128)}', space=vmem, size = 0x12000, scoped, tag = 'internal scratch']
  #allocation2 [shape = 'f32[8,512]{1,0:T(8,128)}', space=vmem, size = 0x4000, scoped, tag = 'scratch operand']
  #allocation3 [shape = 'f32[8,512]{1,0:T(8,128)}', space=vmem, size = 0x4000, scoped, tag = 'scratch operand']
  %s0 = inlined_call_operand.hbm [shape: f32[16,784], index: 0, kind: input, shape index: {}]
  %s1 = inlined_call_operand.hbm [shape: f32[784,512], index: 1, kind: input, shape index: {}]
  %s2 = inlined_call_operand.hbm [shape: f32[1,512], index: 2, kind: input, shape index: {}]
  %s3 = inlined_call_operand.hbm [shape: f32[512,512], index: 3, kind: input, shape index: {}]
  %s4 = inlined_call_operand.hbm [shape: f32[1,512], index: 4, kind: input, shape index: {}]
  %s5 = inlined_call_operand.hbm [shape: f32[512,128], index: 5, kind: input, shape index: {}]
  %s6 = inlined_call_operand.hbm [shape: f32[1,128], index: 6, kind: input, shape index: {}]
  %s7 = inlined_call_operand.hbm [shape: f32[16,128], index: 7, kind: output, shape index: {}]
  %s8 = sld [smem:[#allocation0]]
  $region89: #{tpu_custom_call.1} parent=0
    _
  %s10 = ssub.s32 1, %s8
  %s11 = scalar_select 0, %s10, %s8
  $region1: #{tpu_custom_call.1} parent=0
    #allocation4 [shape = 'u8[57344]{0}', space=vmem, size = 0xe000, scoped, tag = 'input window, operand 0']
    #allocation5 [shape = 's32[2]{0}', space=sflag, size = 0x8, scoped, tag = 'scoped memory for tpu_custom_call.1']
    #allocation6 [shape = 's32[2]{0}', space=sflag, size = 0x8, scoped, tag = 'scoped memory for tpu_custom_call.1']
    #allocation7 [shape = 'u8[1605632]{0}', space=vmem, size = 0x188000, scoped, tag = 'input window, operand 1, single buffered']
    #allocation8 [shape = 's32[1]{0}', space=sflag, size = 0x4, scoped, tag = 'scoped memory for tpu_custom_call.1']
    #allocation9 [shape = 'u8[2048]{0}', space=vmem, size = 0x800, scoped, tag = 'input window, operand 2, single buffered']
    #allocation10 [shape = 'u8[1048576]{0}', space=vmem, size = 0x100000, scoped, tag = 'input window, operand 3, single buffered']
    #allocation11 [shape = 's32[1]{0}', space=sflag, size = 0x4, scoped, tag = 'scoped memory for tpu_custom_call.1']
    #allocation12 [shape = 'u8[2048]{0}', space=vmem, size = 0x800, scoped, tag = 'input window, operand 4, single buffered']
    #allocation13 [shape = 'u8[262144]{0}', space=vmem, size = 0x40000, scoped, tag = 'input window, operand 5, single buffered']
    #allocation14 [shape = 's32[1]{0}', space=sflag, size = 0x4, scoped, tag = 'scoped memory for tpu_custom_call.1']
    #allocation15 [shape = 'u8[512]{0}', space=vmem, size = 0x400, scoped, tag = 'input window, operand 6, single buffered']
    #allocation16 [shape = 'u8[8192]{0}', space=vmem, size = 0x2000, scoped, tag = 'output window, operand 0']
    %12 = vsyncpa [#allocation5], 0
    %s13 = scalar_lea.sflag [#allocation5], 1
    %14 = vsyncpa %s13, 0
    %15 = vsyncpa [#allocation8], 0
    %16 = vsyncpa [#allocation11], 0
    %17 = vsyncpa [#allocation14], 0
    %18 = vsyncpa [#allocation6], 0
    %s19 = scalar_lea.sflag [#allocation6], 1
    %20 = vsyncpa %s19, 0
    loop: start=0, step=1, limit=4
    $region2: #{tpu_custom_call.1} parent=1 // loop_pre_header
      _
    $region3: #{tpu_custom_call.1} parent=1 // loop_header
      %s22 = sphi 0, %s26
      %p23 = scmp.ge.s32.totalorder %s22, 4
      %s32 = sphi 0, %s34
      %s35 = sphi 0, %s32
      %s36 = sphi 0, %s35
      %s52 = sphi 0, %s36
      %s56 = sphi 0, %s56
      %s58 = sphi 0, %s56
      %s59 = sphi 0, %s58
      %s73 = sphi 0, %s59
      %s77 = sphi 0, %s77
      %s79 = sphi 0, %s77
      %s80 = sphi 0, %s79
      %s94 = sphi 0, %s80
      %s98 = sphi 0, %s98
      %s100 = sphi 0, %s98
      %s101 = sphi 0, %s100
      %s115 = sphi 0, %s101
      %s119 = sphi 0, %s119
      %s121 = sphi 0, %s119
      %s122 = sphi 0, %s121
      %s136 = sphi 0, %s122
      %s140 = sphi 0, %s140
      %s142 = sphi 0, %s140
      %s143 = sphi 0, %s142
      %s157 = sphi 0, %s143
      %s161 = sphi 0, %s161
      %s163 = sphi 0, %s161
      %s164 = sphi 0, %s163
      %s178 = sphi 0, %s164
      %s184 = sphi 0, %s186
      %s187 = sphi 0, %s184
      %s188 = sphi 0, %s187
      %s204 = sphi 0, %s188
    $region4: #{tpu_custom_call.1} parent=1 // loop_header_branch
      %25 = sbr.rel (%p23) target = $region8
    $region5: #{tpu_custom_call.1} parent=1 // loop_body
      %s27 = ssub.s32 %s22, 1
      %s28 = ssub.s32 %s22, 2
      %s29 = sadd.s32 %s22, 1
      %s30 = ssub.s32 %s22, %s29
      %p31 = scmp.eq.s32.totalorder %s30, 0
      %s33 = sadd.s32 %s32, 1
      %s34 = scalar_select %p31, %s32, %s33
      %p37 = pneg %p31
      %p38 = scmp.eq.s32.totalorder %s22, 1
      %p39 = por %p37, %p38
      %p40 = scmp.ne.s32.totalorder %s32, %s35
      %p41 = scmp.eq.s32.totalorder %s22, 0
      %p42 = por %p40, %p41
      %p43 = scmp.ne.s32.totalorder %s32, %s35
      %p44 = scmp.eq.s32.totalorder %s27, 1
      %p45 = por %p43, %p44
      %p46 = scmp.ne.s32.totalorder %s35, %s36
      %p47 = scmp.eq.s32.totalorder %s27, 0
      %p48 = por %p46, %p47
      %p49 = scmp.ne.s32.totalorder %s35, %s36
      %p50 = scmp.eq.s32.totalorder %s28, 1
      %p51 = por %p49, %p50
      %p53 = scmp.ne.s32.totalorder %s36, %s52
      %p54 = scmp.eq.s32.totalorder %s28, 0
      %p55 = por %p53, %p54
      %s57 = sadd.s32 %s56, 1
      %p60 = scmp.eq.s32.totalorder %s22, 1
      %p61 = scmp.ne.s32.totalorder %s56, %s58
      %p62 = scmp.eq.s32.totalorder %s22, 0
      %p63 = por %p61, %p62
      %p64 = scmp.ne.s32.totalorder %s56, %s58
      %p65 = scmp.eq.s32.totalorder %s27, 1
      %p66 = por %p64, %p65
      %p67 = scmp.ne.s32.totalorder %s58, %s59
      %p68 = scmp.eq.s32.totalorder %s27, 0
      %p69 = por %p67, %p68
      %p70 = scmp.ne.s32.totalorder %s58, %s59
      %p71 = scmp.eq.s32.totalorder %s28, 1
      %p72 = por %p70, %p71
      %p74 = scmp.ne.s32.totalorder %s59, %s73
      %p75 = scmp.eq.s32.totalorder %s28, 0
      %p76 = por %p74, %p75
      %s78 = sadd.s32 %s77, 1
      %p81 = scmp.eq.s32.totalorder %s22, 1
      %p82 = scmp.ne.s32.totalorder %s77, %s79
      %p83 = scmp.eq.s32.totalorder %s22, 0
      %p84 = por %p82, %p83
      %p85 = scmp.ne.s32.totalorder %s77, %s79
      %p86 = scmp.eq.s32.totalorder %s27, 1
      %p87 = por %p85, %p86
      %p88 = scmp.ne.s32.totalorder %s79, %s80
      %p89 = scmp.eq.s32.totalorder %s27, 0
      %p90 = por %p88, %p89
      %p91 = scmp.ne.s32.totalorder %s79, %s80
      %p92 = scmp.eq.s32.totalorder %s28, 1
      %p93 = por %p91, %p92
      %p95 = scmp.ne.s32.totalorder %s80, %s94
      %p96 = scmp.eq.s32.totalorder %s28, 0
      %p97 = por %p95, %p96
      %s99 = sadd.s32 %s98, 1
      %p102 = scmp.eq.s32.totalorder %s22, 1
      %p103 = scmp.ne.s32.totalorder %s98, %s100
      %p104 = scmp.eq.s32.totalorder %s22, 0
      %p105 = por %p103, %p104
      %p106 = scmp.ne.s32.totalorder %s98, %s100
      %p107 = scmp.eq.s32.totalorder %s27, 1
      %p108 = por %p106, %p107
      %p109 = scmp.ne.s32.totalorder %s100, %s101
      %p110 = scmp.eq.s32.totalorder %s27, 0
      %p111 = por %p109, %p110
      %p112 = scmp.ne.s32.totalorder %s100, %s101
      %p113 = scmp.eq.s32.totalorder %s28, 1
      %p114 = por %p112, %p113
      %p116 = scmp.ne.s32.totalorder %s101, %s115
      %p117 = scmp.eq.s32.totalorder %s28, 0
      %p118 = por %p116, %p117
      %s120 = sadd.s32 %s119, 1
      %p123 = scmp.eq.s32.totalorder %s22, 1
      %p124 = scmp.ne.s32.totalorder %s119, %s121
      %p125 = scmp.eq.s32.totalorder %s22, 0
      %p126 = por %p124, %p125
      %p127 = scmp.ne.s32.totalorder %s119, %s121
      %p128 = scmp.eq.s32.totalorder %s27, 1
      %p129 = por %p127, %p128
      %p130 = scmp.ne.s32.totalorder %s121, %s122
      %p131 = scmp.eq.s32.totalorder %s27, 0
      %p132 = por %p130, %p131
      %p133 = scmp.ne.s32.totalorder %s121, %s122
      %p134 = scmp.eq.s32.totalorder %s28, 1
      %p135 = por %p133, %p134
      %p137 = scmp.ne.s32.totalorder %s122, %s136
      %p138 = scmp.eq.s32.totalorder %s28, 0
      %p139 = por %p137, %p138
      %s141 = sadd.s32 %s140, 1
      %p144 = scmp.eq.s32.totalorder %s22, 1
      %p145 = scmp.ne.s32.totalorder %s140, %s142
      %p146 = scmp.eq.s32.totalorder %s22, 0
      %p147 = por %p145, %p146
      %p148 = scmp.ne.s32.totalorder %s140, %s142
      %p149 = scmp.eq.s32.totalorder %s27, 1
      %p150 = por %p148, %p149
      %p151 = scmp.ne.s32.totalorder %s142, %s143
      %p152 = scmp.eq.s32.totalorder %s27, 0
      %p153 = por %p151, %p152
      %p154 = scmp.ne.s32.totalorder %s142, %s143
      %p155 = scmp.eq.s32.totalorder %s28, 1
      %p156 = por %p154, %p155
      %p158 = scmp.ne.s32.totalorder %s143, %s157
      %p159 = scmp.eq.s32.totalorder %s28, 0
      %p160 = por %p158, %p159
      %s162 = sadd.s32 %s161, 1
      %p165 = scmp.eq.s32.totalorder %s22, 1
      %p166 = scmp.ne.s32.totalorder %s161, %s163
      %p167 = scmp.eq.s32.totalorder %s22, 0
      %p168 = por %p166, %p167
      %p169 = scmp.ne.s32.totalorder %s161, %s163
      %p170 = scmp.eq.s32.totalorder %s27, 1
      %p171 = por %p169, %p170
      %p172 = scmp.ne.s32.totalorder %s163, %s164
      %p173 = scmp.eq.s32.totalorder %s27, 0
      %p174 = por %p172, %p173
      %p175 = scmp.ne.s32.totalorder %s163, %s164
      %p176 = scmp.eq.s32.totalorder %s28, 1
      %p177 = por %p175, %p176
      %p179 = scmp.ne.s32.totalorder %s164, %s178
      %p180 = scmp.eq.s32.totalorder %s28, 0
      %p181 = por %p179, %p180
      %s182 = ssub.s32 %s22, %s29
      %p183 = scmp.eq.s32.totalorder %s182, 0
      %s185 = sadd.s32 %s184, 1
      %s186 = scalar_select %p183, %s184, %s185
      %p189 = pneg %p183
      %p190 = scmp.eq.s32.totalorder %s22, 1
      %p191 = por %p189, %p190
      %p192 = scmp.ne.s32.totalorder %s184, %s187
      %p193 = scmp.eq.s32.totalorder %s22, 0
      %p194 = por %p192, %p193
      %p195 = scmp.ne.s32.totalorder %s184, %s187
      %p196 = scmp.eq.s32.totalorder %s27, 1
      %p197 = por %p195, %p196
      %p198 = scmp.ne.s32.totalorder %s187, %s188
      %p199 = scmp.eq.s32.totalorder %s27, 0
      %p200 = por %p198, %p199
      %p201 = scmp.ne.s32.totalorder %s187, %s188
      %p202 = scmp.eq.s32.totalorder %s28, 1
      %p203 = por %p201, %p202
      %p205 = scmp.ne.s32.totalorder %s188, %s204
      %p206 = scmp.eq.s32.totalorder %s28, 0
      %p207 = por %p205, %p206
      %p208 = scmp.le.s32.totalorder 1, %s22
      %p209 = scmp.lt.s32.totalorder %s22, 3
      %p210 = pnand %p208, %p209
      %p211 = pneg %p210
      // Predicated region
      $region9: #{tpu_custom_call.1} parent=5 // pred_check
        _
      $region10: #{tpu_custom_call.1} parent=5 // pred_check_branch
        %213 = sbr.rel (%p210) target = $region12
      $region11: #{tpu_custom_call.1} parent=5 // pred_region
        %s214 = ssub.s32 %s22, 1
        // Predicated region
        $region13: #{tpu_custom_call.1} parent=11 // pred_check
          %p215 = pneg %p69
        $region14: #{tpu_custom_call.1} parent=11 // pred_check_branch
          %217 = sbr.rel (%p215) target = $region16
        $region15: #{tpu_custom_call.1} parent=11 // pred_region
          %s219 = ssub.s32 50176, 50176
          %220 = vsyncadd [#allocation8], %s219
          %s221 = sshll.u32 [#allocation7], 4
          %s222 = int_to_ptr.vmem [resolvable:$true] %s221
          %227 = dma.hbm_to_vmem [thread:$0]  %s1, 50176, %s222, [#allocation8], 512, 512, 32
        $region16: #{tpu_custom_call.1} parent=11 // pred_fallthru
          _
        // Predicated region
        $region17: #{tpu_custom_call.1} parent=11 // pred_check
          %p228 = pneg %p90
        $region18: #{tpu_custom_call.1} parent=11 // pred_check_branch
          %230 = sbr.rel (%p228) target = $region20
        $region19: #{tpu_custom_call.1} parent=11 // pred_region
          %s232 = ssub.s32 64, 64
          %233 = vsyncadd [#allocation8], %s232
          %s235 = sshll.u32 [#allocation9], 4
          %s236 = int_to_ptr.vmem [resolvable:$true] %s235
          %238 = dma.hbm_to_vmem [thread:$0]  %s2, 64, %s236, [#allocation8]
        $region20: #{tpu_custom_call.1} parent=11 // pred_fallthru
          _
        // Predicated region
        $region21: #{tpu_custom_call.1} parent=11 // pred_check
          %p239 = pneg %p111
        $region22: #{tpu_custom_call.1} parent=11 // pred_check_branch
          %241 = sbr.rel (%p239) target = $region24
        $region23: #{tpu_custom_call.1} parent=11 // pred_region
          %s243 = ssub.s32 32768, 32768
          %244 = vsyncadd [#allocation11], %s243
          %s245 = sshll.u32 [#allocation10], 4
          %s246 = int_to_ptr.vmem [resolvable:$true] %s245
          %251 = dma.hbm_to_vmem [thread:$0]  %s3, 32768, %s246, [#allocation11], 512, 512, 32
        $region24: #{tpu_custom_call.1} parent=11 // pred_fallthru
          _
        // Predicated region
        $region25: #{tpu_custom_call.1} parent=11 // pred_check
          %p252 = pneg %p132
        $region26: #{tpu_custom_call.1} parent=11 // pred_check_branch
          %254 = sbr.rel (%p252) target = $region28
        $region27: #{tpu_custom_call.1} parent=11 // pred_region
          %s256 = ssub.s32 64, 64
          %257 = vsyncadd [#allocation11], %s256
          %s259 = sshll.u32 [#allocation12], 4
          %s260 = int_to_ptr.vmem [resolvable:$true] %s259
          %262 = dma.hbm_to_vmem [thread:$0]  %s4, 64, %s260, [#allocation11]
        $region28: #{tpu_custom_call.1} parent=11 // pred_fallthru
          _
        // Predicated region
        $region29: #{tpu_custom_call.1} parent=11 // pred_check
          %p263 = pneg %p153
        $region30: #{tpu_custom_call.1} parent=11 // pred_check_branch
          %265 = sbr.rel (%p263) target = $region32
        $region31: #{tpu_custom_call.1} parent=11 // pred_region
          %s267 = ssub.s32 8192, 8192
          %268 = vsyncadd [#allocation14], %s267
          %s269 = sshll.u32 [#allocation13], 4
          %s270 = int_to_ptr.vmem [resolvable:$true] %s269
          %275 = dma.hbm_to_vmem [thread:$0]  %s5, 8192, %s270, [#allocation14], 128, 128, 8
        $region32: #{tpu_custom_call.1} parent=11 // pred_fallthru
          _
        // Predicated region
        $region33: #{tpu_custom_call.1} parent=11 // pred_check
          %p276 = pneg %p174
        $region34: #{tpu_custom_call.1} parent=11 // pred_check_branch
          %278 = sbr.rel (%p276) target = $region36
        $region35: #{tpu_custom_call.1} parent=11 // pred_region
          %s280 = ssub.s32 16, 16
          %281 = vsyncadd [#allocation14], %s280
          %s283 = sshll.u32 [#allocation15], 4
          %s284 = int_to_ptr.vmem [resolvable:$true] %s283
          %286 = dma.hbm_to_vmem [thread:$0]  %s6, 16, %s284, [#allocation14]
        $region36: #{tpu_custom_call.1} parent=11 // pred_fallthru
          _
      $region12: #{tpu_custom_call.1} parent=5 // pred_fallthru
        _
      %p287 = scmp.lt.s32.totalorder %s22, 2
      // Predicated region
      $region37: #{tpu_custom_call.1} parent=5 // pred_check
        %p288 = pneg %p287
      $region38: #{tpu_custom_call.1} parent=5 // pred_check_branch
        %290 = sbr.rel (%p288) target = $region40
      $region39: #{tpu_custom_call.1} parent=5 // pred_region
        // Predicated region
        $region41: #{tpu_custom_call.1} parent=39 // pred_check
          %p291 = pneg %p42
        $region42: #{tpu_custom_call.1} parent=39 // pred_check_branch
          %293 = sbr.rel (%p291) target = $region44
        $region43: #{tpu_custom_call.1} parent=39 // pred_region
          %s294 = sand.u32 %s32, 1
          %s295 = scalar_lea.sflag [#allocation5], %s294
          %s296 = sand.u32 %s32, 1
          %s297 = smul.addr %s296, 56
          %s298 = scalar_lea.vmem [#allocation4], %s297
          %s300 = ssub.s32 896, 896
          %301 = vsyncadd %s295, %s300
          %s302 = smul.addr %s22, 7
          %s303 = smul.addr %s302, 128
          %s304 = scalar_lea.hbm %s0, %s303
          %s306 = sshll.u32 %s298, 4
          %s307 = int_to_ptr.vmem [resolvable:$true] %s306
          %309 = dma.hbm_to_vmem [thread:$0]  %s304, 896, %s307, %s295
        $region44: #{tpu_custom_call.1} parent=39 // pred_fallthru
          _
      $region40: #{tpu_custom_call.1} parent=5 // pred_fallthru
        _
      %p310 = scmp.le.s32.totalorder 1, %s22
      %p311 = scmp.lt.s32.totalorder %s22, 3
      %p312 = pnand %p310, %p311
      %p313 = pneg %p312
      // Predicated region
      $region45: #{tpu_custom_call.1} parent=5 // pred_check
        _
      $region46: #{tpu_custom_call.1} parent=5 // pred_check_branch
        %315 = sbr.rel (%p312) target = $region48
      $region47: #{tpu_custom_call.1} parent=5 // pred_region
        %s316 = ssub.s32 %s22, 1
        %s317 = sand.u32 %s35, 1
        %s318 = scalar_lea.sflag [#allocation5], %s317
        %s319 = sand.u32 %s35, 1
        %s320 = smul.addr %s319, 56
        %s321 = scalar_lea.vmem [#allocation4], %s320
        // Predicated region
        $region49: #{tpu_custom_call.1} parent=47 // pred_check
          %p322 = pneg %p48
        $region50: #{tpu_custom_call.1} parent=47 // pred_check_branch
          %324 = sbr.rel (%p322) target = $region52
        $region51: #{tpu_custom_call.1} parent=47 // pred_region
          %325 = dma.done %s318, 896
        $region52: #{tpu_custom_call.1} parent=47 // pred_fallthru
          _
        // Predicated region
        $region53: #{tpu_custom_call.1} parent=47 // pred_check
          %p326 = pneg %p69
        $region54: #{tpu_custom_call.1} parent=47 // pred_check_branch
          %328 = sbr.rel (%p326) target = $region56
        $region55: #{tpu_custom_call.1} parent=47 // pred_region
          %329 = dma.done [#allocation8], 50176
        $region56: #{tpu_custom_call.1} parent=47 // pred_fallthru
          _
        // Predicated region
        $region57: #{tpu_custom_call.1} parent=47 // pred_check
          %p330 = pneg %p90
        $region58: #{tpu_custom_call.1} parent=47 // pred_check_branch
          %332 = sbr.rel (%p330) target = $region60
        $region59: #{tpu_custom_call.1} parent=47 // pred_region
          %333 = dma.done [#allocation8], 64
        $region60: #{tpu_custom_call.1} parent=47 // pred_fallthru
          _
        // Predicated region
        $region61: #{tpu_custom_call.1} parent=47 // pred_check
          %p334 = pneg %p111
        $region62: #{tpu_custom_call.1} parent=47 // pred_check_branch
          %336 = sbr.rel (%p334) target = $region64
        $region63: #{tpu_custom_call.1} parent=47 // pred_region
          %337 = dma.done [#allocation11], 32768
        $region64: #{tpu_custom_call.1} parent=47 // pred_fallthru
          _
        // Predicated region
        $region65: #{tpu_custom_call.1} parent=47 // pred_check
          %p338 = pneg %p132
        $region66: #{tpu_custom_call.1} parent=47 // pred_check_branch
          %340 = sbr.rel (%p338) target = $region68
        $region67: #{tpu_custom_call.1} parent=47 // pred_region
          %341 = dma.done [#allocation11], 64
        $region68: #{tpu_custom_call.1} parent=47 // pred_fallthru
          _
        // Predicated region
        $region69: #{tpu_custom_call.1} parent=47 // pred_check
          %p342 = pneg %p153
        $region70: #{tpu_custom_call.1} parent=47 // pred_check_branch
          %344 = sbr.rel (%p342) target = $region72
        $region71: #{tpu_custom_call.1} parent=47 // pred_region
          %345 = dma.done [#allocation14], 8192
        $region72: #{tpu_custom_call.1} parent=47 // pred_fallthru
          _
        // Predicated region
        $region73: #{tpu_custom_call.1} parent=47 // pred_check
          %p346 = pneg %p174
        $region74: #{tpu_custom_call.1} parent=47 // pred_check_branch
          %348 = sbr.rel (%p346) target = $region76
        $region75: #{tpu_custom_call.1} parent=47 // pred_region
          %349 = dma.done [#allocation14], 16
        $region76: #{tpu_custom_call.1} parent=47 // pred_fallthru
          _
        %s350 = sand.u32 %s35, 1
        %s351 = scalar_lea.sflag [#allocation5], %s350
        %s352 = sand.u32 %s35, 1
        %s353 = smul.addr %s352, 56
        %s354 = scalar_lea.vmem [#allocation4], %s353
        %p355 = pneg %p48
        %p356 = pneg %p45
        %p357 = pneg %p69
        %p358 = pneg %p66
        %p359 = pneg %p90
        %p360 = pneg %p87
        %p361 = pneg %p111
        %p362 = pneg %p108
        %p363 = pneg %p132
        %p364 = pneg %p129
        %p365 = pneg %p153
        %p366 = pneg %p150
        %p367 = pneg %p174
        %p368 = pneg %p171
        %p369 = pneg %p200
        %p370 = pneg %p197
        %s371 = sand.u32 %s187, 1
        %s372 = scalar_lea.sflag [#allocation6], %s371
        %s373 = sand.u32 %s187, 1
        %s374 = smul.addr %s373, 8
        %s375 = scalar_lea.vmem [#allocation16], %s374
        %v376 = vld [vmem:[%s321] sm:$0xff]
        %v377 = vld [vmem:[%s321 + $0x8] sm:$0xff]
        %v378 = vld [vmem:[%s321 + $0x10] sm:$0xff]
        %v379 = vld [vmem:[%s321 + $0x18] sm:$0xff]
        %v380 = vld [vmem:[%s321 + $0x20] sm:$0xff]
        %v381 = vld [vmem:[%s321 + $0x28] sm:$0xff]
        %v382 = vld [vmem:[%s321 + $0x30] sm:$0xff]
        %v383 = vld [vmem:[#allocation7] sm:$0xff]
        %v384 = vld [vmem:[#allocation7 + $0x8] sm:$0xff]
        %v385 = vld [vmem:[#allocation7 + $0x10] sm:$0xff]
        %v386 = vld [vmem:[#allocation7 + $0x18] sm:$0xff]
        %v387 = vld [vmem:[#allocation7 + $0x20] sm:$0xff]
        %v388 = vld [vmem:[#allocation7 + $0x28] sm:$0xff]
        %v389 = vld [vmem:[#allocation7 + $0x30] sm:$0xff]
        %v390 = vld [vmem:[#allocation7 + $0x38] sm:$0xff]
        %v391 = vld [vmem:[#allocation7 + $0x40] sm:$0xff]
        %v392 = vld [vmem:[#allocation7 + $0x48] sm:$0xff]
        %v393 = vld [vmem:[#allocation7 + $0x50] sm:$0xff]
        %v394 = vld [vmem:[#allocation7 + $0x58] sm:$0xff]
        %v395 = vld [vmem:[#allocation7 + $0x60] sm:$0xff]
        %v396 = vld [vmem:[#allocation7 + $0x68] sm:$0xff]
        %v397 = vld [vmem:[#allocation7 + $0x70] sm:$0xff]
        %v398 = vld [vmem:[#allocation7 + $0x78] sm:$0xff]
        %v399 = vld [vmem:[#allocation7 + $0x80] sm:$0xff]
        %v400 = vld [vmem:[#allocation7 + $0x88] sm:$0xff]
        %v401 = vld [vmem:[#allocation7 + $0x90] sm:$0xff]
        %v402 = vld [vmem:[#allocation7 + $0x98] sm:$0xff]
        %v403 = vld [vmem:[#allocation7 + $0xa0] sm:$0xff]
        %v404 = vld [vmem:[#allocation7 + $0xa8] sm:$0xff]
        %v405 = vld [vmem:[#allocation7 + $0xb0] sm:$0xff]
        %v406 = vld [vmem:[#allocation7 + $0xb8] sm:$0xff]
        %v407 = vld [vmem:[#allocation7 + $0xc0] sm:$0xff]
        %v408 = vld [vmem:[#allocation7 + $0xc8] sm:$0xff]
        %v409 = vld [vmem:[#allocation7 + $0xd0] sm:$0xff]
        %v410 = vld [vmem:[#allocation7 + $0xd8] sm:$0xff]
        %v411 = vld [vmem:[#allocation7 + $0xe0] sm:$0xff]
        %v412 = vld [vmem:[#allocation7 + $0xe8] sm:$0xff]
        %v413 = vld [vmem:[#allocation7 + $0xf0] sm:$0xff]
        %v414 = vld [vmem:[#allocation7 + $0xf8] sm:$0xff]
        %v415 = vld [vmem:[#allocation7 + $0x100] sm:$0xff]
        %v416 = vld [vmem:[#allocation7 + $0x108] sm:$0xff]
        %v417 = vld [vmem:[#allocation7 + $0x110] sm:$0xff]
        %v418 = vld [vmem:[#allocation7 + $0x118] sm:$0xff]
        %v419 = vld [vmem:[#allocation7 + $0x120] sm:$0xff]
        %v420 = vld [vmem:[#allocation7 + $0x128] sm:$0xff]
        %v421 = vld [vmem:[#allocation7 + $0x130] sm:$0xff]
        %v422 = vld [vmem:[#allocation7 + $0x138] sm:$0xff]
        %v423 = vld [vmem:[#allocation7 + $0x140] sm:$0xff]
        %v424 = vld [vmem:[#allocation7 + $0x148] sm:$0xff]
        %v425 = vld [vmem:[#allocation7 + $0x150] sm:$0xff]
        %v426 = vld [vmem:[#allocation7 + $0x158] sm:$0xff]
        %v427 = vld [vmem:[#allocation7 + $0x160] sm:$0xff]
        %v428 = vld [vmem:[#allocation7 + $0x168] sm:$0xff]
        %v429 = vld [vmem:[#allocation7 + $0x170] sm:$0xff]
        %v430 = vld [vmem:[#allocation7 + $0x178] sm:$0xff]
        %v431 = vld [vmem:[#allocation7 + $0x180] sm:$0xff]
        %v432 = vld [vmem:[#allocation7 + $0x188] sm:$0xff]
        %v433 = vld [vmem:[#allocation7 + $0x190] sm:$0xff]
        %v434 = vld [vmem:[#allocation7 + $0x198] sm:$0xff]
        %v435 = vld [vmem:[#allocation7 + $0x1a0] sm:$0xff]
        %v436 = vld [vmem:[#allocation7 + $0x1a8] sm:$0xff]
        %v437 = vld [vmem:[#allocation7 + $0x1b0] sm:$0xff]
        %v438 = vld [vmem:[#allocation7 + $0x1b8] sm:$0xff]
        %v439 = vld [vmem:[#allocation7 + $0x1c0] sm:$0xff]
        %v440 = vld [vmem:[#allocation7 + $0x1c8] sm:$0xff]
        %v441 = vld [vmem:[#allocation7 + $0x1d0] sm:$0xff]
        %v442 = vld [vmem:[#allocation7 + $0x1d8] sm:$0xff]
        %v443 = vld [vmem:[#allocation7 + $0x1e0] sm:$0xff]
        %v444 = vld [vmem:[#allocation7 + $0x1e8] sm:$0xff]
        %v445 = vld [vmem:[#allocation7 + $0x1f0] sm:$0xff]
        %v446 = vld [vmem:[#allocation7 + $0x1f8] sm:$0xff]
        %v447 = vld [vmem:[#allocation7 + $0x200] sm:$0xff]
        %v448 = vld [vmem:[#allocation7 + $0x208] sm:$0xff]
        %v449 = vld [vmem:[#allocation7 + $0x210] sm:$0xff]
        %v450 = vld [vmem:[#allocation7 + $0x218] sm:$0xff]
        %v451 = vld [vmem:[#allocation7 + $0x220] sm:$0xff]
        %v452 = vld [vmem:[#allocation7 + $0x228] sm:$0xff]
        %v453 = vld [vmem:[#allocation7 + $0x230] sm:$0xff]
        %v454 = vld [vmem:[#allocation7 + $0x238] sm:$0xff]
        %v455 = vld [vmem:[#allocation7 + $0x240] sm:$0xff]
        %v456 = vld [vmem:[#allocation7 + $0x248] sm:$0xff]
        %v457 = vld [vmem:[#allocation7 + $0x250] sm:$0xff]
        %v458 = vld [vmem:[#allocation7 + $0x258] sm:$0xff]
        %v459 = vld [vmem:[#allocation7 + $0x260] sm:$0xff]
        %v460 = vld [vmem:[#allocation7 + $0x268] sm:$0xff]
        %v461 = vld [vmem:[#allocation7 + $0x270] sm:$0xff]
        %v462 = vld [vmem:[#allocation7 + $0x278] sm:$0xff]
        %v463 = vld [vmem:[#allocation7 + $0x280] sm:$0xff]
        %v464 = vld [vmem:[#allocation7 + $0x288] sm:$0xff]
        %v465 = vld [vmem:[#allocation7 + $0x290] sm:$0xff]
        %v466 = vld [vmem:[#allocation7 + $0x298] sm:$0xff]
        %v467 = vld [vmem:[#allocation7 + $0x2a0] sm:$0xff]
        %v468 = vld [vmem:[#allocation7 + $0x2a8] sm:$0xff]
        %v469 = vld [vmem:[#allocation7 + $0x2b0] sm:$0xff]
        %v470 = vld [vmem:[#allocation7 + $0x2b8] sm:$0xff]
        %v471 = vld [vmem:[#allocation7 + $0x2c0] sm:$0xff]
        %v472 = vld [vmem:[#allocation7 + $0x2c8] sm:$0xff]
        %v473 = vld [vmem:[#allocation7 + $0x2d0] sm:$0xff]
        %v474 = vld [vmem:[#allocation7 + $0x2d8] sm:$0xff]
        %v475 = vld [vmem:[#allocation7 + $0x2e0] sm:$0xff]
        %v476 = vld [vmem:[#allocation7 + $0x2e8] sm:$0xff]
        %v477 = vld [vmem:[#allocation7 + $0x2f0] sm:$0xff]
        %v478 = vld [vmem:[#allocation7 + $0x2f8] sm:$0xff]
        %v479 = vld [vmem:[#allocation7 + $0x300] sm:$0xff]
        %v480 = vld [vmem:[#allocation7 + $0x308] sm:$0xff]
        %v481 = vld [vmem:[#allocation7 + $0x310] sm:$0xff]
        %v482 = vld [vmem:[#allocation7 + $0x318] sm:$0xff]
        %v483 = vld [vmem:[#allocation7 + $0x320] sm:$0xff]
        %v484 = vld [vmem:[#allocation7 + $0x328] sm:$0xff]
        %v485 = vld [vmem:[#allocation7 + $0x330] sm:$0xff]
        %v486 = vld [vmem:[#allocation7 + $0x338] sm:$0xff]
        %v487 = vld [vmem:[#allocation7 + $0x340] sm:$0xff]
        %v488 = vld [vmem:[#allocation7 + $0x348] sm:$0xff]
        %v489 = vld [vmem:[#allocation7 + $0x350] sm:$0xff]
        %v490 = vld [vmem:[#allocation7 + $0x358] sm:$0xff]
        %v491 = vld [vmem:[#allocation7 + $0x360] sm:$0xff]
        %v492 = vld [vmem:[#allocation7 + $0x368] sm:$0xff]
        %v493 = vld [vmem:[#allocation7 + $0x370] sm:$0xff]
        %v494 = vld [vmem:[#allocation7 + $0x378] sm:$0xff]
        %v495 = vld [vmem:[#allocation7 + $0x380] sm:$0xff]
        %v496 = vld [vmem:[#allocation7 + $0x388] sm:$0xff]
        %v497 = vld [vmem:[#allocation7 + $0x390] sm:$0xff]
        %v498 = vld [vmem:[#allocation7 + $0x398] sm:$0xff]
        %v499 = vld [vmem:[#allocation7 + $0x3a0] sm:$0xff]
        %v500 = vld [vmem:[#allocation7 + $0x3a8] sm:$0xff]
        %v501 = vld [vmem:[#allocation7 + $0x3b0] sm:$0xff]
        %v502 = vld [vmem:[#allocation7 + $0x3b8] sm:$0xff]
        %v503 = vld [vmem:[#allocation7 + $0x3c0] sm:$0xff]
        %v504 = vld [vmem:[#allocation7 + $0x3c8] sm:$0xff]
        %v505 = vld [vmem:[#allocation7 + $0x3d0] sm:$0xff]
        %v506 = vld [vmem:[#allocation7 + $0x3d8] sm:$0xff]
        %v507 = vld [vmem:[#allocation7 + $0x3e0] sm:$0xff]
        %v508 = vld [vmem:[#allocation7 + $0x3e8] sm:$0xff]
        %v509 = vld [vmem:[#allocation7 + $0x3f0] sm:$0xff]
        %v510 = vld [vmem:[#allocation7 + $0x3f8] sm:$0xff]
        %v511 = vld [vmem:[#allocation7 + $0x400] sm:$0xff]
        %v512 = vld [vmem:[#allocation7 + $0x408] sm:$0xff]
        %v513 = vld [vmem:[#allocation7 + $0x410] sm:$0xff]
        %v514 = vld [vmem:[#allocation7 + $0x418] sm:$0xff]
        %v515 = vld [vmem:[#allocation7 + $0x420] sm:$0xff]
        %v516 = vld [vmem:[#allocation7 + $0x428] sm:$0xff]
        %v517 = vld [vmem:[#allocation7 + $0x430] sm:$0xff]
        %v518 = vld [vmem:[#allocation7 + $0x438] sm:$0xff]
        %v519 = vld [vmem:[#allocation7 + $0x440] sm:$0xff]
        %v520 = vld [vmem:[#allocation7 + $0x448] sm:$0xff]
        %v521 = vld [vmem:[#allocation7 + $0x450] sm:$0xff]
        %v522 = vld [vmem:[#allocation7 + $0x458] sm:$0xff]
        %v523 = vld [vmem:[#allocation7 + $0x460] sm:$0xff]
        %v524 = vld [vmem:[#allocation7 + $0x468] sm:$0xff]
        %v525 = vld [vmem:[#allocation7 + $0x470] sm:$0xff]
        %v526 = vld [vmem:[#allocation7 + $0x478] sm:$0xff]
        %v527 = vld [vmem:[#allocation7 + $0x480] sm:$0xff]
        %v528 = vld [vmem:[#allocation7 + $0x488] sm:$0xff]
        %v529 = vld [vmem:[#allocation7 + $0x490] sm:$0xff]
        %v530 = vld [vmem:[#allocation7 + $0x498] sm:$0xff]
        %v531 = vld [vmem:[#allocation7 + $0x4a0] sm:$0xff]
        %v532 = vld [vmem:[#allocation7 + $0x4a8] sm:$0xff]
        %v533 = vld [vmem:[#allocation7 + $0x4b0] sm:$0xff]
        %v534 = vld [vmem:[#allocation7 + $0x4b8] sm:$0xff]
        %v535 = vld [vmem:[#allocation7 + $0x4c0] sm:$0xff]
        %v536 = vld [vmem:[#allocation7 + $0x4c8] sm:$0xff]
        %v537 = vld [vmem:[#allocation7 + $0x4d0] sm:$0xff]
        %v538 = vld [vmem:[#allocation7 + $0x4d8] sm:$0xff]
        %v539 = vld [vmem:[#allocation7 + $0x4e0] sm:$0xff]
        %v540 = vld [vmem:[#allocation7 + $0x4e8] sm:$0xff]
        %v541 = vld [vmem:[#allocation7 + $0x4f0] sm:$0xff]
        %v542 = vld [vmem:[#allocation7 + $0x4f8] sm:$0xff]
        %v543 = vld [vmem:[#allocation7 + $0x500] sm:$0xff]
        %v544 = vld [vmem:[#allocation7 + $0x508] sm:$0xff]
        %v545 = vld [vmem:[#allocation7 + $0x510] sm:$0xff]
        %v546 = vld [vmem:[#allocation7 + $0x518] sm:$0xff]
        %v547 = vld [vmem:[#allocation7 + $0x520] sm:$0xff]
        %v548 = vld [vmem:[#allocation7 + $0x528] sm:$0xff]
        %v549 = vld [vmem:[#allocation7 + $0x530] sm:$0xff]
        %v550 = vld [vmem:[#allocation7 + $0x538] sm:$0xff]
        %v551 = vld [vmem:[#allocation7 + $0x540] sm:$0xff]
        %v552 = vld [vmem:[#allocation7 + $0x548] sm:$0xff]
        %v553 = vld [vmem:[#allocation7 + $0x550] sm:$0xff]
        %v554 = vld [vmem:[#allocation7 + $0x558] sm:$0xff]
        %v555 = vld [vmem:[#allocation7 + $0x560] sm:$0xff]
        %v556 = vld [vmem:[#allocation7 + $0x568] sm:$0xff]
        %v557 = vld [vmem:[#allocation7 + $0x570] sm:$0xff]
        %v558 = vld [vmem:[#allocation7 + $0x578] sm:$0xff]
        %v559 = vld [vmem:[#allocation7 + $0x580] sm:$0xff]
        %v560 = vld [vmem:[#allocation7 + $0x588] sm:$0xff]
        %v561 = vld [vmem:[#allocation7 + $0x590] sm:$0xff]
        %v562 = vld [vmem:[#allocation7 + $0x598] sm:$0xff]
        %v563 = vld [vmem:[#allocation7 + $0x5a0] sm:$0xff]
        %v564 = vld [vmem:[#allocation7 + $0x5a8] sm:$0xff]
        %v565 = vld [vmem:[#allocation7 + $0x5b0] sm:$0xff]
        %v566 = vld [vmem:[#allocation7 + $0x5b8] sm:$0xff]
        %v567 = vld [vmem:[#allocation7 + $0x5c0] sm:$0xff]
        %v568 = vld [vmem:[#allocation7 + $0x5c8] sm:$0xff]
        %v569 = vld [vmem:[#allocation7 + $0x5d0] sm:$0xff]
        %v570 = vld [vmem:[#allocation7 + $0x5d8] sm:$0xff]
        %v571 = vld [vmem:[#allocation7 + $0x5e0] sm:$0xff]
        %v572 = vld [vmem:[#allocation7 + $0x5e8] sm:$0xff]
        %v573 = vld [vmem:[#allocation7 + $0x5f0] sm:$0xff]
        %v574 = vld [vmem:[#allocation7 + $0x5f8] sm:$0xff]
        %v575 = vld [vmem:[#allocation7 + $0x600] sm:$0xff]
        %v576 = vld [vmem:[#allocation7 + $0x608] sm:$0xff]
        %v577 = vld [vmem:[#allocation7 + $0x610] sm:$0xff]
        %v578 = vld [vmem:[#allocation7 + $0x618] sm:$0xff]
        %v579 = vld [vmem:[#allocation7 + $0x620] sm:$0xff]
        %v580 = vld [vmem:[#allocation7 + $0x628] sm:$0xff]
        %v581 = vld [vmem:[#allocation7 + $0x630] sm:$0xff]
        %v582 = vld [vmem:[#allocation7 + $0x638] sm:$0xff]
        %v583 = vld [vmem:[#allocation7 + $0x640] sm:$0xff]
        %v584 = vld [vmem:[#allocation7 + $0x648] sm:$0xff]
        %v585 = vld [vmem:[#allocation7 + $0x650] sm:$0xff]
        %v586 = vld [vmem:[#allocation7 + $0x658] sm:$0xff]
        %v587 = vld [vmem:[#allocation7 + $0x660] sm:$0xff]
        %v588 = vld [vmem:[#allocation7 + $0x668] sm:$0xff]
        %v589 = vld [vmem:[#allocation7 + $0x670] sm:$0xff]
        %v590 = vld [vmem:[#allocation7 + $0x678] sm:$0xff]
        %v591 = vld [vmem:[#allocation7 + $0x680] sm:$0xff]
        %v592 = vld [vmem:[#allocation7 + $0x688] sm:$0xff]
        %v593 = vld [vmem:[#allocation7 + $0x690] sm:$0xff]
        %v594 = vld [vmem:[#allocation7 + $0x698] sm:$0xff]
        %v595 = vld [vmem:[#allocation7 + $0x6a0] sm:$0xff]
        %v596 = vld [vmem:[#allocation7 + $0x6a8] sm:$0xff]
        %v597 = vld [vmem:[#allocation7 + $0x6b0] sm:$0xff]
        %v598 = vld [vmem:[#allocation7 + $0x6b8] sm:$0xff]
        %v599 = vld [vmem:[#allocation7 + $0x6c0] sm:$0xff]
        %v600 = vld [vmem:[#allocation7 + $0x6c8] sm:$0xff]
        %v601 = vld [vmem:[#allocation7 + $0x6d0] sm:$0xff]
        %v602 = vld [vmem:[#allocation7 + $0x6d8] sm:$0xff]
        %v603 = vld [vmem:[#allocation7 + $0x6e0] sm:$0xff]
        %v604 = vld [vmem:[#allocation7 + $0x6e8] sm:$0xff]
        %v605 = vld [vmem:[#allocation7 + $0x6f0] sm:$0xff]
        %v606 = vld [vmem:[#allocation7 + $0x6f8] sm:$0xff]
        %v607 = vld [vmem:[#allocation7 + $0x700] sm:$0xff]
        %v608 = vld [vmem:[#allocation7 + $0x708] sm:$0xff]
        %v609 = vld [vmem:[#allocation7 + $0x710] sm:$0xff]
        %v610 = vld [vmem:[#allocation7 + $0x718] sm:$0xff]
        %v611 = vld [vmem:[#allocation7 + $0x720] sm:$0xff]
        %v612 = vld [vmem:[#allocation7 + $0x728] sm:$0xff]
        %v613 = vld [vmem:[#allocation7 + $0x730] sm:$0xff]
        %v614 = vld [vmem:[#allocation7 + $0x738] sm:$0xff]
        %v615 = vld [vmem:[#allocation7 + $0x740] sm:$0xff]
        %v616 = vld [vmem:[#allocation7 + $0x748] sm:$0xff]
        %v617 = vld [vmem:[#allocation7 + $0x750] sm:$0xff]
        %v618 = vld [vmem:[#allocation7 + $0x758] sm:$0xff]
        %v619 = vld [vmem:[#allocation7 + $0x760] sm:$0xff]
        %v620 = vld [vmem:[#allocation7 + $0x768] sm:$0xff]
        %v621 = vld [vmem:[#allocation7 + $0x770] sm:$0xff]
        %v622 = vld [vmem:[#allocation7 + $0x778] sm:$0xff]
        %v623 = vld [vmem:[#allocation7 + $0x780] sm:$0xff]
        %v624 = vld [vmem:[#allocation7 + $0x788] sm:$0xff]
        %v625 = vld [vmem:[#allocation7 + $0x790] sm:$0xff]
        %v626 = vld [vmem:[#allocation7 + $0x798] sm:$0xff]
        %v627 = vld [vmem:[#allocation7 + $0x7a0] sm:$0xff]
        %v628 = vld [vmem:[#allocation7 + $0x7a8] sm:$0xff]
        %v629 = vld [vmem:[#allocation7 + $0x7b0] sm:$0xff]
        %v630 = vld [vmem:[#allocation7 + $0x7b8] sm:$0xff]
        %v631 = vld [vmem:[#allocation7 + $0x7c0] sm:$0xff]
        %v632 = vld [vmem:[#allocation7 + $0x7c8] sm:$0xff]
        %v633 = vld [vmem:[#allocation7 + $0x7d0] sm:$0xff]
        %v634 = vld [vmem:[#allocation7 + $0x7d8] sm:$0xff]
        %v635 = vld [vmem:[#allocation7 + $0x7e0] sm:$0xff]
        %v636 = vld [vmem:[#allocation7 + $0x7e8] sm:$0xff]
        %v637 = vld [vmem:[#allocation7 + $0x7f0] sm:$0xff]
        %v638 = vld [vmem:[#allocation7 + $0x7f8] sm:$0xff]
        %v639 = vld [vmem:[#allocation7 + $0x800] sm:$0xff]
        %v640 = vld [vmem:[#allocation7 + $0x808] sm:$0xff]
        %v641 = vld [vmem:[#allocation7 + $0x810] sm:$0xff]
        %v642 = vld [vmem:[#allocation7 + $0x818] sm:$0xff]
        %v643 = vld [vmem:[#allocation7 + $0x820] sm:$0xff]
        %v644 = vld [vmem:[#allocation7 + $0x828] sm:$0xff]
        %v645 = vld [vmem:[#allocation7 + $0x830] sm:$0xff]
        %v646 = vld [vmem:[#allocation7 + $0x838] sm:$0xff]
        %v647 = vld [vmem:[#allocation7 + $0x840] sm:$0xff]
        %v648 = vld [vmem:[#allocation7 + $0x848] sm:$0xff]
        %v649 = vld [vmem:[#allocation7 + $0x850] sm:$0xff]
        %v650 = vld [vmem:[#allocation7 + $0x858] sm:$0xff]
        %v651 = vld [vmem:[#allocation7 + $0x860] sm:$0xff]
        %v652 = vld [vmem:[#allocation7 + $0x868] sm:$0xff]
        %v653 = vld [vmem:[#allocation7 + $0x870] sm:$0xff]
        %v654 = vld [vmem:[#allocation7 + $0x878] sm:$0xff]
        %v655 = vld [vmem:[#allocation7 + $0x880] sm:$0xff]
        %v656 = vld [vmem:[#allocation7 + $0x888] sm:$0xff]
        %v657 = vld [vmem:[#allocation7 + $0x890] sm:$0xff]
        %v658 = vld [vmem:[#allocation7 + $0x898] sm:$0xff]
        %v659 = vld [vmem:[#allocation7 + $0x8a0] sm:$0xff]
        %v660 = vld [vmem:[#allocation7 + $0x8a8] sm:$0xff]
        %v661 = vld [vmem:[#allocation7 + $0x8b0] sm:$0xff]
        %v662 = vld [vmem:[#allocation7 + $0x8b8] sm:$0xff]
        %v663 = vld [vmem:[#allocation7 + $0x8c0] sm:$0xff]
        %v664 = vld [vmem:[#allocation7 + $0x8c8] sm:$0xff]
        %v665 = vld [vmem:[#allocation7 + $0x8d0] sm:$0xff]
        %v666 = vld [vmem:[#allocation7 + $0x8d8] sm:$0xff]
        %v667 = vld [vmem:[#allocation7 + $0x8e0] sm:$0xff]
        %v668 = vld [vmem:[#allocation7 + $0x8e8] sm:$0xff]
        %v669 = vld [vmem:[#allocation7 + $0x8f0] sm:$0xff]
        %v670 = vld [vmem:[#allocation7 + $0x8f8] sm:$0xff]
        %v671 = vld [vmem:[#allocation7 + $0x900] sm:$0xff]
        %v672 = vld [vmem:[#allocation7 + $0x908] sm:$0xff]
        %v673 = vld [vmem:[#allocation7 + $0x910] sm:$0xff]
        %v674 = vld [vmem:[#allocation7 + $0x918] sm:$0xff]
        %v675 = vld [vmem:[#allocation7 + $0x920] sm:$0xff]
        %v676 = vld [vmem:[#allocation7 + $0x928] sm:$0xff]
        %v677 = vld [vmem:[#allocation7 + $0x930] sm:$0xff]
        %v678 = vld [vmem:[#allocation7 + $0x938] sm:$0xff]
        %v679 = vld [vmem:[#allocation7 + $0x940] sm:$0xff]
        %v680 = vld [vmem:[#allocation7 + $0x948] sm:$0xff]
        %v681 = vld [vmem:[#allocation7 + $0x950] sm:$0xff]
        %v682 = vld [vmem:[#allocation7 + $0x958] sm:$0xff]
        %v683 = vld [vmem:[#allocation7 + $0x960] sm:$0xff]
        %v684 = vld [vmem:[#allocation7 + $0x968] sm:$0xff]
        %v685 = vld [vmem:[#allocation7 + $0x970] sm:$0xff]
        %v686 = vld [vmem:[#allocation7 + $0x978] sm:$0xff]
        %v687 = vld [vmem:[#allocation7 + $0x980] sm:$0xff]
        %v688 = vld [vmem:[#allocation7 + $0x988] sm:$0xff]
        %v689 = vld [vmem:[#allocation7 + $0x990] sm:$0xff]
        %v690 = vld [vmem:[#allocation7 + $0x998] sm:$0xff]
        %v691 = vld [vmem:[#allocation7 + $0x9a0] sm:$0xff]
        %v692 = vld [vmem:[#allocation7 + $0x9a8] sm:$0xff]
        %v693 = vld [vmem:[#allocation7 + $0x9b0] sm:$0xff]
        %v694 = vld [vmem:[#allocation7 + $0x9b8] sm:$0xff]
        %v695 = vld [vmem:[#allocation7 + $0x9c0] sm:$0xff]
        %v696 = vld [vmem:[#allocation7 + $0x9c8] sm:$0xff]
        %v697 = vld [vmem:[#allocation7 + $0x9d0] sm:$0xff]
        %v698 = vld [vmem:[#allocation7 + $0x9d8] sm:$0xff]
        %v699 = vld [vmem:[#allocation7 + $0x9e0] sm:$0xff]
        %v700 = vld [vmem:[#allocation7 + $0x9e8] sm:$0xff]
        %v701 = vld [vmem:[#allocation7 + $0x9f0] sm:$0xff]
        %v702 = vld [vmem:[#allocation7 + $0x9f8] sm:$0xff]
        %v703 = vld [vmem:[#allocation7 + $0xa00] sm:$0xff]
        %v704 = vld [vmem:[#allocation7 + $0xa08] sm:$0xff]
        %v705 = vld [vmem:[#allocation7 + $0xa10] sm:$0xff]
        %v706 = vld [vmem:[#allocation7 + $0xa18] sm:$0xff]
        %v707 = vld [vmem:[#allocation7 + $0xa20] sm:$0xff]
        %v708 = vld [vmem:[#allocation7 + $0xa28] sm:$0xff]
        %v709 = vld [vmem:[#allocation7 + $0xa30] sm:$0xff]
        %v710 = vld [vmem:[#allocation7 + $0xa38] sm:$0xff]
        %v711 = vld [vmem:[#allocation7 + $0xa40] sm:$0xff]
        %v712 = vld [vmem:[#allocation7 + $0xa48] sm:$0xff]
        %v713 = vld [vmem:[#allocation7 + $0xa50] sm:$0xff]
        %v714 = vld [vmem:[#allocation7 + $0xa58] sm:$0xff]
        %v715 = vld [vmem:[#allocation7 + $0xa60] sm:$0xff]
        %v716 = vld [vmem:[#allocation7 + $0xa68] sm:$0xff]
        %v717 = vld [vmem:[#allocation7 + $0xa70] sm:$0xff]
        %v718 = vld [vmem:[#allocation7 + $0xa78] sm:$0xff]
        %v719 = vld [vmem:[#allocation7 + $0xa80] sm:$0xff]
        %v720 = vld [vmem:[#allocation7 + $0xa88] sm:$0xff]
        %v721 = vld [vmem:[#allocation7 + $0xa90] sm:$0xff]
        %v722 = vld [vmem:[#allocation7 + $0xa98] sm:$0xff]
        %v723 = vld [vmem:[#allocation7 + $0xaa0] sm:$0xff]
        %v724 = vld [vmem:[#allocation7 + $0xaa8] sm:$0xff]
        %v725 = vld [vmem:[#allocation7 + $0xab0] sm:$0xff]
        %v726 = vld [vmem:[#allocation7 + $0xab8] sm:$0xff]
        %v727 = vld [vmem:[#allocation7 + $0xac0] sm:$0xff]
        %v728 = vld [vmem:[#allocation7 + $0xac8] sm:$0xff]
        %v729 = vld [vmem:[#allocation7 + $0xad0] sm:$0xff]
        %v730 = vld [vmem:[#allocation7 + $0xad8] sm:$0xff]
        %v731 = vld [vmem:[#allocation7 + $0xae0] sm:$0xff]
        %v732 = vld [vmem:[#allocation7 + $0xae8] sm:$0xff]
        %v733 = vld [vmem:[#allocation7 + $0xaf0] sm:$0xff]
        %v734 = vld [vmem:[#allocation7 + $0xaf8] sm:$0xff]
        %v735 = vld [vmem:[#allocation7 + $0xb00] sm:$0xff]
        %v736 = vld [vmem:[#allocation7 + $0xb08] sm:$0xff]
        %v737 = vld [vmem:[#allocation7 + $0xb10] sm:$0xff]
        %v738 = vld [vmem:[#allocation7 + $0xb18] sm:$0xff]
        %v739 = vld [vmem:[#allocation7 + $0xb20] sm:$0xff]
        %v740 = vld [vmem:[#allocation7 + $0xb28] sm:$0xff]
        %v741 = vld [vmem:[#allocation7 + $0xb30] sm:$0xff]
        %v742 = vld [vmem:[#allocation7 + $0xb38] sm:$0xff]
        %v743 = vld [vmem:[#allocation7 + $0xb40] sm:$0xff]
        %v744 = vld [vmem:[#allocation7 + $0xb48] sm:$0xff]
        %v745 = vld [vmem:[#allocation7 + $0xb50] sm:$0xff]
        %v746 = vld [vmem:[#allocation7 + $0xb58] sm:$0xff]
        %v747 = vld [vmem:[#allocation7 + $0xb60] sm:$0xff]
        %v748 = vld [vmem:[#allocation7 + $0xb68] sm:$0xff]
        %v749 = vld [vmem:[#allocation7 + $0xb70] sm:$0xff]
        %v750 = vld [vmem:[#allocation7 + $0xb78] sm:$0xff]
        %v751 = vld [vmem:[#allocation7 + $0xb80] sm:$0xff]
        %v752 = vld [vmem:[#allocation7 + $0xb88] sm:$0xff]
        %v753 = vld [vmem:[#allocation7 + $0xb90] sm:$0xff]
        %v754 = vld [vmem:[#allocation7 + $0xb98] sm:$0xff]
        %v755 = vld [vmem:[#allocation7 + $0xba0] sm:$0xff]
        %v756 = vld [vmem:[#allocation7 + $0xba8] sm:$0xff]
        %v757 = vld [vmem:[#allocation7 + $0xbb0] sm:$0xff]
        %v758 = vld [vmem:[#allocation7 + $0xbb8] sm:$0xff]
        %v759 = vld [vmem:[#allocation7 + $0xbc0] sm:$0xff]
        %v760 = vld [vmem:[#allocation7 + $0xbc8] sm:$0xff]
        %v761 = vld [vmem:[#allocation7 + $0xbd0] sm:$0xff]
        %v762 = vld [vmem:[#allocation7 + $0xbd8] sm:$0xff]
        %v763 = vld [vmem:[#allocation7 + $0xbe0] sm:$0xff]
        %v764 = vld [vmem:[#allocation7 + $0xbe8] sm:$0xff]
        %v765 = vld [vmem:[#allocation7 + $0xbf0] sm:$0xff]
        %v766 = vld [vmem:[#allocation7 + $0xbf8] sm:$0xff]
        %v767 = vld [vmem:[#allocation7 + $0xc00] sm:$0xff]
        %v768 = vld [vmem:[#allocation7 + $0xc08] sm:$0xff]
        %v769 = vld [vmem:[#allocation7 + $0xc10] sm:$0xff]
        %v770 = vld [vmem:[#allocation7 + $0xc18] sm:$0xff]
        %v771 = vld [vmem:[#allocation7 + $0xc20] sm:$0xff]
        %v772 = vld [vmem:[#allocation7 + $0xc28] sm:$0xff]
        %v773 = vld [vmem:[#allocation7 + $0xc30] sm:$0xff]
        %v774 = vld [vmem:[#allocation7 + $0xc38] sm:$0xff]
        %v775 = vld [vmem:[#allocation9] sm:$0xf]
        %v777 = vlaneseq
        %v778 = vshrl.u32 %v777, 7
        %v779 = vsub.s32 0, %v778
        %v780 = vrot.slane %v775, %v779
        %v781 = vlaneseq
        %v782 = vshrl.u32 %v781, 7
        %v783 = vsub.s32 1, %v782
        %v784 = vrot.slane %v775, %v783
        %v785 = vlaneseq
        %v786 = vshrl.u32 %v785, 7
        %v787 = vsub.s32 2, %v786
        %v788 = vrot.slane %v775, %v787
        %v789 = vlaneseq
        %v790 = vshrl.u32 %v789, 7
        %v791 = vsub.s32 3, %v790
        %v792 = vrot.slane %v775, %v791
        %vm797 = vcmask 130048
        %v799 = vsel %vm797, %v382, 0
        %801 = vmatprep.subr.mxu0 %v384
        %802 = vmatpush1.msra.mxu0 %v383
        %803 = vmatprep.subr.mxu0 %v388
        %804 = vmatpush1.msra.mxu0 %v387
        %805 = vmatprep.subr.mxu0 %v392
        %806 = vmatpush1.msra.mxu0 %v391
        %807 = vmatprep.subr.mxu0 %v396
        %808 = vmatpush1.msra.mxu0 %v395
        %809 = vmatprep.subr.mxu0 %v400
        %810 = vmatpush1.msra.mxu0 %v399
        %811 = vmatprep.subr.mxu0 %v404
        %812 = vmatpush1.msra.mxu0 %v403
        %813 = vmatprep.subr.mxu0 %v408
        %814 = vmatpush1.msra.mxu0 %v407
        %815 = vmatprep.subr.mxu0 %v412
        %816 = vmatpush1.msra.mxu0 %v411
        %817 = vmatprep.subr.mxu0 %v416
        %818 = vmatpush1.msra.mxu0 %v415
        %819 = vmatprep.subr.mxu0 %v420
        %820 = vmatpush1.msra.mxu0 %v419
        %821 = vmatprep.subr.mxu0 %v424
        %822 = vmatpush1.msra.mxu0 %v423
        %823 = vmatprep.subr.mxu0 %v428
        %824 = vmatpush1.msra.mxu0 %v427
        %825 = vmatprep.subr.mxu0 %v432
        %826 = vmatpush1.msra.mxu0 %v431
        %827 = vmatprep.subr.mxu0 %v436
        %828 = vmatpush1.msra.mxu0 %v435
        %829 = vmatprep.subr.mxu0 %v440
        %830 = vmatpush1.msra.mxu0 %v439
        %831 = vmatprep.subr.mxu0 %v444
        %832 = vmatpush1.msra.mxu0 %v443
        %833 = vmatprep.subr.mxu0 %v448
        %834 = vmatpush1.msra.mxu0 %v447
        %835 = vmatprep.subr.mxu0 %v452
        %836 = vmatpush1.msra.mxu0 %v451
        %837 = vmatprep.subr.mxu0 %v456
        %838 = vmatpush1.msra.mxu0 %v455
        %839 = vmatprep.subr.mxu0 %v460
        %840 = vmatpush1.msra.mxu0 %v459
        %841 = vmatprep.subr.mxu0 %v464
        %842 = vmatpush1.msra.mxu0 %v463
        %843 = vmatprep.subr.mxu0 %v468
        %844 = vmatpush1.msra.mxu0 %v467
        %845 = vmatprep.subr.mxu0 %v472
        %846 = vmatpush1.msra.mxu0 %v471
        %847 = vmatprep.subr.mxu0 %v476
        %848 = vmatpush1.msra.mxu0 %v475
        %849 = vmatprep.subr.mxu0 %v480
        %850 = vmatpush1.msra.mxu0 %v479
        %851 = vmatprep.subr.mxu0 %v484
        %852 = vmatpush1.msra.mxu0 %v483
        %853 = vmatprep.subr.mxu0 %v488
        %854 = vmatpush1.msra.mxu0 %v487
        %855 = vmatprep.subr.mxu0 %v492
        %856 = vmatpush1.msra.mxu0 %v491
        %857 = vmatprep.subr.mxu0 %v496
        %858 = vmatpush1.msra.mxu0 %v495
        %859 = vmatprep.subr.mxu0 %v500
        %860 = vmatpush1.msra.mxu0 %v499
        %861 = vmatprep.subr.mxu0 %v504
        %862 = vmatpush1.msra.mxu0 %v503
        %863 = vmatprep.subr.mxu0 %v508
        %864 = vmatpush1.msra.mxu0 %v507
        %865 = vmatprep.mubr.f32.mxu0 %v377
        %866 = vmatmul.mubr.f32.gmra.mrb[0].mxu0 %v376
        %v867 = vpop.f32.mrb[0].mxu0
        %v868 = vadd.f32 %v780, %v867
        %v869 = vpop.f32.mrb[0].mxu0
        %v870 = vadd.f32 %v784, %v869
        %871 = vdwg.mxu0
        %872 = vmatprep.subr.mxu0 %v512
        %873 = vmatpush1.msra.mxu0 %v511
        %874 = vmatprep.subr.mxu0 %v516
        %875 = vmatpush1.msra.mxu0 %v515
        %876 = vmatprep.subr.mxu0 %v520
        %877 = vmatpush1.msra.mxu0 %v519
        %878 = vmatprep.subr.mxu0 %v524
        %879 = vmatpush1.msra.mxu0 %v523
        %880 = vmatprep.subr.mxu0 %v528
        %881 = vmatpush1.msra.mxu0 %v527
        %882 = vmatprep.subr.mxu0 %v532
        %883 = vmatpush1.msra.mxu0 %v531
        %884 = vmatprep.subr.mxu0 %v536
        %885 = vmatpush1.msra.mxu0 %v535
        %886 = vmatprep.subr.mxu0 %v540
        %887 = vmatpush1.msra.mxu0 %v539
        %888 = vmatprep.subr.mxu0 %v544
        %889 = vmatpush1.msra.mxu0 %v543
        %890 = vmatprep.subr.mxu0 %v548
        %891 = vmatpush1.msra.mxu0 %v547
        %892 = vmatprep.subr.mxu0 %v552
        %893 = vmatpush1.msra.mxu0 %v551
        %894 = vmatprep.subr.mxu0 %v556
        %895 = vmatpush1.msra.mxu0 %v555
        %896 = vmatprep.subr.mxu0 %v560
        %897 = vmatpush1.msra.mxu0 %v559
        %898 = vmatprep.subr.mxu0 %v564
        %899 = vmatpush1.msra.mxu0 %v563
        %900 = vmatprep.subr.mxu0 %v568
        %901 = vmatpush1.msra.mxu0 %v567
        %902 = vmatprep.subr.mxu0 %v572
        %903 = vmatpush1.msra.mxu0 %v571
        %904 = vmatprep.subr.mxu0 %v576
        %905 = vmatpush1.msra.mxu0 %v575
        %906 = vmatprep.subr.mxu0 %v580
        %907 = vmatpush1.msra.mxu0 %v579
        %908 = vmatprep.subr.mxu0 %v584
        %909 = vmatpush1.msra.mxu0 %v583
        %910 = vmatprep.subr.mxu0 %v588
        %911 = vmatpush1.msra.mxu0 %v587
        %912 = vmatprep.subr.mxu0 %v592
        %913 = vmatpush1.msra.mxu0 %v591
        %914 = vmatprep.subr.mxu0 %v596
        %915 = vmatpush1.msra.mxu0 %v595
        %916 = vmatprep.subr.mxu0 %v600
        %917 = vmatpush1.msra.mxu0 %v599
        %918 = vmatprep.subr.mxu0 %v604
        %919 = vmatpush1.msra.mxu0 %v603
        %920 = vmatprep.subr.mxu0 %v608
        %921 = vmatpush1.msra.mxu0 %v607
        %922 = vmatprep.subr.mxu0 %v612
        %923 = vmatpush1.msra.mxu0 %v611
        %924 = vmatprep.subr.mxu0 %v616
        %925 = vmatpush1.msra.mxu0 %v615
        %926 = vmatprep.subr.mxu0 %v620
        %927 = vmatpush1.msra.mxu0 %v619
        %928 = vmatprep.subr.mxu0 %v624
        %929 = vmatpush1.msra.mxu0 %v623
        %930 = vmatprep.subr.mxu0 %v628
        %931 = vmatpush1.msra.mxu0 %v627
        %932 = vmatprep.subr.mxu0 %v632
        %933 = vmatpush1.msra.mxu0 %v631
        %934 = vmatprep.subr.mxu0 %v636
        %935 = vmatpush1.msra.mxu0 %v635
        %936 = vmatprep.mubr.f32.mxu0 %v379
        %937 = vmatmul.mubr.f32.gmra.mrb[0].mxu0 %v378
        %v938 = vpop.f32.mrb[0].mxu0
        %v939 = vadd.f32 %v868, %v938
        %v940 = vpop.f32.mrb[0].mxu0
        %v941 = vadd.f32 %v870, %v940
        %942 = vdwg.mxu0
        %943 = vmatprep.subr.mxu0 %v640
        %944 = vmatpush1.msra.mxu0 %v639
        %945 = vmatprep.subr.mxu0 %v644
        %946 = vmatpush1.msra.mxu0 %v643
        %947 = vmatprep.subr.mxu0 %v648
        %948 = vmatpush1.msra.mxu0 %v647
        %949 = vmatprep.subr.mxu0 %v652
        %950 = vmatpush1.msra.mxu0 %v651
        %951 = vmatprep.subr.mxu0 %v656
        %952 = vmatpush1.msra.mxu0 %v655
        %953 = vmatprep.subr.mxu0 %v660
        %954 = vmatpush1.msra.mxu0 %v659
        %955 = vmatprep.subr.mxu0 %v664
        %956 = vmatpush1.msra.mxu0 %v663
        %957 = vmatprep.subr.mxu0 %v668
        %958 = vmatpush1.msra.mxu0 %v667
        %959 = vmatprep.subr.mxu0 %v672
        %960 = vmatpush1.msra.mxu0 %v671
        %961 = vmatprep.subr.mxu0 %v676
        %962 = vmatpush1.msra.mxu0 %v675
        %963 = vmatprep.subr.mxu0 %v680
        %964 = vmatpush1.msra.mxu0 %v679
        %965 = vmatprep.subr.mxu0 %v684
        %966 = vmatpush1.msra.mxu0 %v683
        %967 = vmatprep.subr.mxu0 %v688
        %968 = vmatpush1.msra.mxu0 %v687
        %969 = vmatprep.subr.mxu0 %v692
        %970 = vmatpush1.msra.mxu0 %v691
        %971 = vmatprep.subr.mxu0 %v696
        %972 = vmatpush1.msra.mxu0 %v695
        %973 = vmatprep.subr.mxu0 %v700
        %974 = vmatpush1.msra.mxu0 %v699
        %975 = vmatprep.subr.mxu0 %v704
        %976 = vmatpush1.msra.mxu0 %v703
        %977 = vmatprep.subr.mxu0 %v708
        %978 = vmatpush1.msra.mxu0 %v707
        %979 = vmatprep.subr.mxu0 %v712
        %980 = vmatpush1.msra.mxu0 %v711
        %981 = vmatprep.subr.mxu0 %v716
        %982 = vmatpush1.msra.mxu0 %v715
        %983 = vmatprep.subr.mxu0 %v720
        %984 = vmatpush1.msra.mxu0 %v719
        %985 = vmatprep.subr.mxu0 %v724
        %986 = vmatpush1.msra.mxu0 %v723
        %987 = vmatprep.subr.mxu0 %v728
        %988 = vmatpush1.msra.mxu0 %v727
        %989 = vmatprep.subr.mxu0 %v732
        %990 = vmatpush1.msra.mxu0 %v731
        %991 = vmatprep.subr.mxu0 %v736
        %992 = vmatpush1.msra.mxu0 %v735
        %993 = vmatprep.subr.mxu0 %v740
        %994 = vmatpush1.msra.mxu0 %v739
        %995 = vmatprep.subr.mxu0 %v744
        %996 = vmatpush1.msra.mxu0 %v743
        %997 = vmatprep.subr.mxu0 %v748
        %998 = vmatpush1.msra.mxu0 %v747
        %999 = vmatprep.subr.mxu0 %v752
        %1000 = vmatpush1.msra.mxu0 %v751
        %1001 = vmatprep.subr.mxu0 %v756
        %1002 = vmatpush1.msra.mxu0 %v755
        %1003 = vmatprep.subr.mxu0 %v760
        %1004 = vmatpush1.msra.mxu0 %v759
        %1005 = vmatprep.subr.mxu0 %v764
        %1006 = vmatpush1.msra.mxu0 %v763
        %1007 = vmatprep.mubr.f32.mxu0 %v381
        %1008 = vmatmul.mubr.f32.gmra.mrb[0].mxu0 %v380
        %v1009 = vpop.f32.mrb[0].mxu0
        %v1010 = vadd.f32 %v939, %v1009
        %v1011 = vpop.f32.mrb[0].mxu0
        %v1012 = vadd.f32 %v941, %v1011
        %1013 = vdwg.mxu0
        %1014 = vmatprep.subr.mxu0 %v768
        %1015 = vmatpush1.msra.mxu0 %v767
        %1016 = vmatprep.subr.mxu0 %v772
        %1017 = vmatpush1.msra.mxu0 %v771
        %1018 = vmatprep.subr.mxu0 0.0
        %1019 = vmatpush1.msra.mxu0 0.0
        %1020 = vmatprep.subr.mxu0 0.0
        %1021 = vmatpush1.msra.mxu0 0.0
        %1022 = vmatprep.subr.mxu0 0.0
        %1023 = vmatpush1.msra.mxu0 0.0
        %1024 = vmatprep.subr.mxu0 0.0
        %1025 = vmatpush1.msra.mxu0 0.0
        %1026 = vmatprep.subr.mxu0 0.0
        %1027 = vmatpush1.msra.mxu0 0.0
        %1028 = vmatprep.subr.mxu0 0.0
        %1029 = vmatpush1.msra.mxu0 0.0
        %1030 = vmatprep.subr.mxu0 0.0
        %1031 = vmatpush1.msra.mxu0 0.0
        %1032 = vmatprep.subr.mxu0 0.0
        %1033 = vmatpush1.msra.mxu0 0.0
        %1034 = vmatprep.subr.mxu0 0.0
        %1035 = vmatpush1.msra.mxu0 0.0
        %1036 = vmatprep.subr.mxu0 0.0
        %1037 = vmatpush1.msra.mxu0 0.0
        %1038 = vmatprep.subr.mxu0 0.0
        %1039 = vmatpush1.msra.mxu0 0.0
        %1040 = vmatprep.subr.mxu0 0.0
        %1041 = vmatpush1.msra.mxu0 0.0
        %1042 = vmatprep.subr.mxu0 0.0
        %1043 = vmatpush1.msra.mxu0 0.0
        %1044 = vmatprep.subr.mxu0 0.0
        %1045 = vmatpush1.msra.mxu0 0.0
        %1046 = vmatprep.subr.mxu0 0.0
        %1047 = vmatpush1.msra.mxu0 0.0
        %1048 = vmatprep.subr.mxu0 0.0
        %1049 = vmatpush1.msra.mxu0 0.0
        %1050 = vmatprep.subr.mxu0 0.0
        %1051 = vmatpush1.msra.mxu0 0.0
        %1052 = vmatprep.subr.mxu0 0.0
        %1053 = vmatpush1.msra.mxu0 0.0
        %1054 = vmatprep.subr.mxu0 0.0
        %1055 = vmatpush1.msra.mxu0 0.0
        %1056 = vmatprep.subr.mxu0 0.0
        %1057 = vmatpush1.msra.mxu0 0.0
        %1058 = vmatprep.subr.mxu0 0.0
        %1059 = vmatpush1.msra.mxu0 0.0
        %1060 = vmatprep.subr.mxu0 0.0
        %1061 = vmatpush1.msra.mxu0 0.0
        %1062 = vmatprep.subr.mxu0 0.0
        %1063 = vmatpush1.msra.mxu0 0.0
        %1064 = vmatprep.subr.mxu0 0.0
        %1065 = vmatpush1.msra.mxu0 0.0
        %1066 = vmatprep.subr.mxu0 0.0
        %1067 = vmatpush1.msra.mxu0 0.0
        %1068 = vmatprep.subr.mxu0 0.0
        %1069 = vmatpush1.msra.mxu0 0.0
        %1070 = vmatprep.subr.mxu0 0.0
        %1071 = vmatpush1.msra.mxu0 0.0
        %1072 = vmatprep.subr.mxu0 0.0
        %1073 = vmatpush1.msra.mxu0 0.0
        %1074 = vmatprep.subr.mxu0 0.0
        %1075 = vmatpush1.msra.mxu0 0.0
        %1076 = vmatprep.subr.mxu0 0.0
        %1077 = vmatpush1.msra.mxu0 0.0
        %1078 = vmatprep.mubr.f32.mxu0 0.0
        %1079 = vmatmul.mubr.f32.gmra.mrb[0].mxu0 %v799
        %v1080 = vpop.f32.mrb[0].mxu0
        %v1081 = vadd.f32 %v1010, %v1080
        %v1082 = vpop.f32.mrb[0].mxu0
        %v1083 = vadd.f32 %v1012, %v1082
        %1084 = vdwg.mxu0
        %1085 = vmatprep.subr.mxu0 %v386
        %1086 = vmatpush1.msra.mxu0 %v385
        %1087 = vmatprep.subr.mxu0 %v390
        %1088 = vmatpush1.msra.mxu0 %v389
        %1089 = vmatprep.subr.mxu0 %v394
        %1090 = vmatpush1.msra.mxu0 %v393
        %1091 = vmatprep.subr.mxu0 %v398
        %1092 = vmatpush1.msra.mxu0 %v397
        %1093 = vmatprep.subr.mxu0 %v402
        %1094 = vmatpush1.msra.mxu0 %v401
        %1095 = vmatprep.subr.mxu0 %v406
        %1096 = vmatpush1.msra.mxu0 %v405
        %1097 = vmatprep.subr.mxu0 %v410
        %1098 = vmatpush1.msra.mxu0 %v409
        %1099 = vmatprep.subr.mxu0 %v414
        %1100 = vmatpush1.msra.mxu0 %v413
        %1101 = vmatprep.subr.mxu0 %v418
        %1102 = vmatpush1.msra.mxu0 %v417
        %1103 = vmatprep.subr.mxu0 %v422
        %1104 = vmatpush1.msra.mxu0 %v421
        %1105 = vmatprep.subr.mxu0 %v426
        %1106 = vmatpush1.msra.mxu0 %v425
        %1107 = vmatprep.subr.mxu0 %v430
        %1108 = vmatpush1.msra.mxu0 %v429
        %1109 = vmatprep.subr.mxu0 %v434
        %1110 = vmatpush1.msra.mxu0 %v433
        %1111 = vmatprep.subr.mxu0 %v438
        %1112 = vmatpush1.msra.mxu0 %v437
        %1113 = vmatprep.subr.mxu0 %v442
        %1114 = vmatpush1.msra.mxu0 %v441
        %1115 = vmatprep.subr.mxu0 %v446
        %1116 = vmatpush1.msra.mxu0 %v445
        %1117 = vmatprep.subr.mxu0 %v450
        %1118 = vmatpush1.msra.mxu0 %v449
        %1119 = vmatprep.subr.mxu0 %v454
        %1120 = vmatpush1.msra.mxu0 %v453
        %1121 = vmatprep.subr.mxu0 %v458
        %1122 = vmatpush1.msra.mxu0 %v457
        %1123 = vmatprep.subr.mxu0 %v462
        %1124 = vmatpush1.msra.mxu0 %v461
        %1125 = vmatprep.subr.mxu0 %v466
        %1126 = vmatpush1.msra.mxu0 %v465
        %1127 = vmatprep.subr.mxu0 %v470
        %1128 = vmatpush1.msra.mxu0 %v469
        %1129 = vmatprep.subr.mxu0 %v474
        %1130 = vmatpush1.msra.mxu0 %v473
        %1131 = vmatprep.subr.mxu0 %v478
        %1132 = vmatpush1.msra.mxu0 %v477
        %1133 = vmatprep.subr.mxu0 %v482
        %1134 = vmatpush1.msra.mxu0 %v481
        %1135 = vmatprep.subr.mxu0 %v486
        %1136 = vmatpush1.msra.mxu0 %v485
        %1137 = vmatprep.subr.mxu0 %v490
        %1138 = vmatpush1.msra.mxu0 %v489
        %1139 = vmatprep.subr.mxu0 %v494
        %1140 = vmatpush1.msra.mxu0 %v493
        %1141 = vmatprep.subr.mxu0 %v498
        %1142 = vmatpush1.msra.mxu0 %v497
        %1143 = vmatprep.subr.mxu0 %v502
        %1144 = vmatpush1.msra.mxu0 %v501
        %1145 = vmatprep.subr.mxu0 %v506
        %1146 = vmatpush1.msra.mxu0 %v505
        %1147 = vmatprep.subr.mxu0 %v510
        %1148 = vmatpush1.msra.mxu0 %v509
        %1149 = vmatprep.mubr.f32.mxu0 %v377
        %1150 = vmatmul.mubr.f32.gmra.mrb[0].mxu0 %v376
        %v1151 = vpop.f32.mrb[0].mxu0
        %v1152 = vadd.f32 %v788, %v1151
        %v1153 = vpop.f32.mrb[0].mxu0
        %v1154 = vadd.f32 %v792, %v1153
        %1155 = vdwg.mxu0
        %1156 = vmatprep.subr.mxu0 %v514
        %1157 = vmatpush1.msra.mxu0 %v513
        %1158 = vmatprep.subr.mxu0 %v518
        %1159 = vmatpush1.msra.mxu0 %v517
        %1160 = vmatprep.subr.mxu0 %v522
        %1161 = vmatpush1.msra.mxu0 %v521
        %1162 = vmatprep.subr.mxu0 %v526
        %1163 = vmatpush1.msra.mxu0 %v525
        %1164 = vmatprep.subr.mxu0 %v530
        %1165 = vmatpush1.msra.mxu0 %v529
        %1166 = vmatprep.subr.mxu0 %v534
        %1167 = vmatpush1.msra.mxu0 %v533
        %1168 = vmatprep.subr.mxu0 %v538
        %1169 = vmatpush1.msra.mxu0 %v537
        %1170 = vmatprep.subr.mxu0 %v542
        %1171 = vmatpush1.msra.mxu0 %v541
        %1172 = vmatprep.subr.mxu0 %v546
        %1173 = vmatpush1.msra.mxu0 %v545
        %1174 = vmatprep.subr.mxu0 %v550
        %1175 = vmatpush1.msra.mxu0 %v549
        %1176 = vmatprep.subr.mxu0 %v554
        %1177 = vmatpush1.msra.mxu0 %v553
        %1178 = vmatprep.subr.mxu0 %v558
        %1179 = vmatpush1.msra.mxu0 %v557
        %1180 = vmatprep.subr.mxu0 %v562
        %1181 = vmatpush1.msra.mxu0 %v561
        %1182 = vmatprep.subr.mxu0 %v566
        %1183 = vmatpush1.msra.mxu0 %v565
        %1184 = vmatprep.subr.mxu0 %v570
        %1185 = vmatpush1.msra.mxu0 %v569
        %1186 = vmatprep.subr.mxu0 %v574
        %1187 = vmatpush1.msra.mxu0 %v573
        %1188 = vmatprep.subr.mxu0 %v578
        %1189 = vmatpush1.msra.mxu0 %v577
        %1190 = vmatprep.subr.mxu0 %v582
        %1191 = vmatpush1.msra.mxu0 %v581
        %1192 = vmatprep.subr.mxu0 %v586
        %1193 = vmatpush1.msra.mxu0 %v585
        %1194 = vmatprep.subr.mxu0 %v590
        %1195 = vmatpush1.msra.mxu0 %v589
        %1196 = vmatprep.subr.mxu0 %v594
        %1197 = vmatpush1.msra.mxu0 %v593
        %1198 = vmatprep.subr.mxu0 %v598
        %1199 = vmatpush1.msra.mxu0 %v597
        %1200 = vmatprep.subr.mxu0 %v602
        %1201 = vmatpush1.msra.mxu0 %v601
        %1202 = vmatprep.subr.mxu0 %v606
        %1203 = vmatpush1.msra.mxu0 %v605
        %1204 = vmatprep.subr.mxu0 %v610
        %1205 = vmatpush1.msra.mxu0 %v609
        %1206 = vmatprep.subr.mxu0 %v614
        %1207 = vmatpush1.msra.mxu0 %v613
        %1208 = vmatprep.subr.mxu0 %v618
        %1209 = vmatpush1.msra.mxu0 %v617
        %1210 = vmatprep.subr.mxu0 %v622
        %1211 = vmatpush1.msra.mxu0 %v621
        %1212 = vmatprep.subr.mxu0 %v626
        %1213 = vmatpush1.msra.mxu0 %v625
        %1214 = vmatprep.subr.mxu0 %v630
        %1215 = vmatpush1.msra.mxu0 %v629
        %1216 = vmatprep.subr.mxu0 %v634
        %1217 = vmatpush1.msra.mxu0 %v633
        %1218 = vmatprep.subr.mxu0 %v638
        %1219 = vmatpush1.msra.mxu0 %v637
        %1220 = vmatprep.mubr.f32.mxu0 %v379
        %1221 = vmatmul.mubr.f32.gmra.mrb[0].mxu0 %v378
        %v1222 = vpop.f32.mrb[0].mxu0
        %v1223 = vadd.f32 %v1152, %v1222
        %v1224 = vpop.f32.mrb[0].mxu0
        %v1225 = vadd.f32 %v1154, %v1224
        %1226 = vdwg.mxu0
        %1227 = vmatprep.subr.mxu0 %v642
        %1228 = vmatpush1.msra.mxu0 %v641
        %1229 = vmatprep.subr.mxu0 %v646
        %1230 = vmatpush1.msra.mxu0 %v645
        %1231 = vmatprep.subr.mxu0 %v650
        %1232 = vmatpush1.msra.mxu0 %v649
        %1233 = vmatprep.subr.mxu0 %v654
        %1234 = vmatpush1.msra.mxu0 %v653
        %1235 = vmatprep.subr.mxu0 %v658
        %1236 = vmatpush1.msra.mxu0 %v657
        %1237 = vmatprep.subr.mxu0 %v662
        %1238 = vmatpush1.msra.mxu0 %v661
        %1239 = vmatprep.subr.mxu0 %v666
        %1240 = vmatpush1.msra.mxu0 %v665
        %1241 = vmatprep.subr.mxu0 %v670
        %1242 = vmatpush1.msra.mxu0 %v669
        %1243 = vmatprep.subr.mxu0 %v674
        %1244 = vmatpush1.msra.mxu0 %v673
        %1245 = vmatprep.subr.mxu0 %v678
        %1246 = vmatpush1.msra.mxu0 %v677
        %1247 = vmatprep.subr.mxu0 %v682
        %1248 = vmatpush1.msra.mxu0 %v681
        %1249 = vmatprep.subr.mxu0 %v686
        %1250 = vmatpush1.msra.mxu0 %v685
        %1251 = vmatprep.subr.mxu0 %v690
        %1252 = vmatpush1.msra.mxu0 %v689
        %1253 = vmatprep.subr.mxu0 %v694
        %1254 = vmatpush1.msra.mxu0 %v693
        %1255 = vmatprep.subr.mxu0 %v698
        %1256 = vmatpush1.msra.mxu0 %v697
        %1257 = vmatprep.subr.mxu0 %v702
        %1258 = vmatpush1.msra.mxu0 %v701
        %1259 = vmatprep.subr.mxu0 %v706
        %1260 = vmatpush1.msra.mxu0 %v705
        %1261 = vmatprep.subr.mxu0 %v710
        %1262 = vmatpush1.msra.mxu0 %v709
        %1263 = vmatprep.subr.mxu0 %v714
        %1264 = vmatpush1.msra.mxu0 %v713
        %1265 = vmatprep.subr.mxu0 %v718
        %1266 = vmatpush1.msra.mxu0 %v717
        %1267 = vmatprep.subr.mxu0 %v722
        %1268 = vmatpush1.msra.mxu0 %v721
        %1269 = vmatprep.subr.mxu0 %v726
        %1270 = vmatpush1.msra.mxu0 %v725
        %1271 = vmatprep.subr.mxu0 %v730
        %1272 = vmatpush1.msra.mxu0 %v729
        %1273 = vmatprep.subr.mxu0 %v734
        %1274 = vmatpush1.msra.mxu0 %v733
        %1275 = vmatprep.subr.mxu0 %v738
        %1276 = vmatpush1.msra.mxu0 %v737
        %1277 = vmatprep.subr.mxu0 %v742
        %1278 = vmatpush1.msra.mxu0 %v741
        %1279 = vmatprep.subr.mxu0 %v746
        %1280 = vmatpush1.msra.mxu0 %v745
        %1281 = vmatprep.subr.mxu0 %v750
        %1282 = vmatpush1.msra.mxu0 %v749
        %1283 = vmatprep.subr.mxu0 %v754
        %1284 = vmatpush1.msra.mxu0 %v753
        %1285 = vmatprep.subr.mxu0 %v758
        %1286 = vmatpush1.msra.mxu0 %v757
        %1287 = vmatprep.subr.mxu0 %v762
        %1288 = vmatpush1.msra.mxu0 %v761
        %1289 = vmatprep.subr.mxu0 %v766
        %1290 = vmatpush1.msra.mxu0 %v765
        %1291 = vmatprep.mubr.f32.mxu0 %v381
        %1292 = vmatmul.mubr.f32.gmra.mrb[0].mxu0 %v380
        %v1293 = vpop.f32.mrb[0].mxu0
        %v1294 = vadd.f32 %v1223, %v1293
        %v1295 = vpop.f32.mrb[0].mxu0
        %v1296 = vadd.f32 %v1225, %v1295
        %1297 = vdwg.mxu0
        %1298 = vmatprep.subr.mxu0 %v770
        %1299 = vmatpush1.msra.mxu0 %v769
        %1300 = vmatprep.subr.mxu0 %v774
        %1301 = vmatpush1.msra.mxu0 %v773
        %1302 = vmatprep.subr.mxu0 0.0
        %1303 = vmatpush1.msra.mxu0 0.0
        %1304 = vmatprep.subr.mxu0 0.0
        %1305 = vmatpush1.msra.mxu0 0.0
        %1306 = vmatprep.subr.mxu0 0.0
        %1307 = vmatpush1.msra.mxu0 0.0
        %1308 = vmatprep.subr.mxu0 0.0
        %1309 = vmatpush1.msra.mxu0 0.0
        %1310 = vmatprep.subr.mxu0 0.0
        %1311 = vmatpush1.msra.mxu0 0.0
        %1312 = vmatprep.subr.mxu0 0.0
        %1313 = vmatpush1.msra.mxu0 0.0
        %1314 = vmatprep.subr.mxu0 0.0
        %1315 = vmatpush1.msra.mxu0 0.0
        %1316 = vmatprep.subr.mxu0 0.0
        %1317 = vmatpush1.msra.mxu0 0.0
        %1318 = vmatprep.subr.mxu0 0.0
        %1319 = vmatpush1.msra.mxu0 0.0
        %1320 = vmatprep.subr.mxu0 0.0
        %1321 = vmatpush1.msra.mxu0 0.0
        %1322 = vmatprep.subr.mxu0 0.0
        %1323 = vmatpush1.msra.mxu0 0.0
        %1324 = vmatprep.subr.mxu0 0.0
        %1325 = vmatpush1.msra.mxu0 0.0
        %1326 = vmatprep.subr.mxu0 0.0
        %1327 = vmatpush1.msra.mxu0 0.0
        %1328 = vmatprep.subr.mxu0 0.0
        %1329 = vmatpush1.msra.mxu0 0.0
        %1330 = vmatprep.subr.mxu0 0.0
        %1331 = vmatpush1.msra.mxu0 0.0
        %1332 = vmatprep.subr.mxu0 0.0
        %1333 = vmatpush1.msra.mxu0 0.0
        %1334 = vmatprep.subr.mxu0 0.0
        %1335 = vmatpush1.msra.mxu0 0.0
        %1336 = vmatprep.subr.mxu0 0.0
        %1337 = vmatpush1.msra.mxu0 0.0
        %1338 = vmatprep.subr.mxu0 0.0
        %1339 = vmatpush1.msra.mxu0 0.0
        %1340 = vmatprep.subr.mxu0 0.0
        %1341 = vmatpush1.msra.mxu0 0.0
        %1342 = vmatprep.subr.mxu0 0.0
        %1343 = vmatpush1.msra.mxu0 0.0
        %1344 = vmatprep.subr.mxu0 0.0
        %1345 = vmatpush1.msra.mxu0 0.0
        %1346 = vmatprep.subr.mxu0 0.0
        %1347 = vmatpush1.msra.mxu0 0.0
        %1348 = vmatprep.subr.mxu0 0.0
        %1349 = vmatpush1.msra.mxu0 0.0
        %1350 = vmatprep.subr.mxu0 0.0
        %1351 = vmatpush1.msra.mxu0 0.0
        %1352 = vmatprep.subr.mxu0 0.0
        %1353 = vmatpush1.msra.mxu0 0.0
        %1354 = vmatprep.subr.mxu0 0.0
        %1355 = vmatpush1.msra.mxu0 0.0
        %1356 = vmatprep.subr.mxu0 0.0
        %1357 = vmatpush1.msra.mxu0 0.0
        %1358 = vmatprep.subr.mxu0 0.0
        %1359 = vmatpush1.msra.mxu0 0.0
        %1360 = vmatprep.subr.mxu0 0.0
        %1361 = vmatpush1.msra.mxu0 0.0
        %1362 = vmatprep.mubr.f32.mxu0 0.0
        %1363 = vmatmul.mubr.f32.gmra.mrb[0].mxu0 %v799
        %v1364 = vpop.f32.mrb[0].mxu0
        %v1365 = vadd.f32 %v1294, %v1364
        %v1366 = vpop.f32.mrb[0].mxu0
        %v1367 = vadd.f32 %v1296, %v1366
        %1368 = vdwg.mxu0
        %v1369 = vmax.f32 %v1081, 0.0
        %v1370 = vmax.f32 %v1083, 0.0
        %v1371 = vmax.f32 %v1365, 0.0
        %v1372 = vmax.f32 %v1367, 0.0
        %1373 = vst [vmem:[#allocation2] sm:$0xff] %v1369
        %1374 = vst [vmem:[#allocation2 + $0x8] sm:$0xff] %v1370
        %1375 = vst [vmem:[#allocation2 + $0x10] sm:$0xff] %v1371
        %1376 = vst [vmem:[#allocation2 + $0x18] sm:$0xff] %v1372
        %v1377 = vld [vmem:[#allocation2] sm:$0xff]
        %v1378 = vld [vmem:[#allocation2 + $0x8] sm:$0xff]
        %v1379 = vld [vmem:[#allocation2 + $0x10] sm:$0xff]
        %v1380 = vld [vmem:[#allocation2 + $0x18] sm:$0xff]
        %v1381 = vld [vmem:[#allocation10] sm:$0xff]
        %v1382 = vld [vmem:[#allocation10 + $0x8] sm:$0xff]
        %v1383 = vld [vmem:[#allocation10 + $0x10] sm:$0xff]
        %v1384 = vld [vmem:[#allocation10 + $0x18] sm:$0xff]
        %v1385 = vld [vmem:[#allocation10 + $0x20] sm:$0xff]
        %v1386 = vld [vmem:[#allocation10 + $0x28] sm:$0xff]
        %v1387 = vld [vmem:[#allocation10 + $0x30] sm:$0xff]
        %v1388 = vld [vmem:[#allocation10 + $0x38] sm:$0xff]
        %v1389 = vld [vmem:[#allocation10 + $0x40] sm:$0xff]
        %v1390 = vld [vmem:[#allocation10 + $0x48] sm:$0xff]
        %v1391 = vld [vmem:[#allocation10 + $0x50] sm:$0xff]
        %v1392 = vld [vmem:[#allocation10 + $0x58] sm:$0xff]
        %v1393 = vld [vmem:[#allocation10 + $0x60] sm:$0xff]
        %v1394 = vld [vmem:[#allocation10 + $0x68] sm:$0xff]
        %v1395 = vld [vmem:[#allocation10 + $0x70] sm:$0xff]
        %v1396 = vld [vmem:[#allocation10 + $0x78] sm:$0xff]
        %v1397 = vld [vmem:[#allocation10 + $0x80] sm:$0xff]
        %v1398 = vld [vmem:[#allocation10 + $0x88] sm:$0xff]
        %v1399 = vld [vmem:[#allocation10 + $0x90] sm:$0xff]
        %v1400 = vld [vmem:[#allocation10 + $0x98] sm:$0xff]
        %v1401 = vld [vmem:[#allocation10 + $0xa0] sm:$0xff]
        %v1402 = vld [vmem:[#allocation10 + $0xa8] sm:$0xff]
        %v1403 = vld [vmem:[#allocation10 + $0xb0] sm:$0xff]
        %v1404 = vld [vmem:[#allocation10 + $0xb8] sm:$0xff]
        %v1405 = vld [vmem:[#allocation10 + $0xc0] sm:$0xff]
        %v1406 = vld [vmem:[#allocation10 + $0xc8] sm:$0xff]
        %v1407 = vld [vmem:[#allocation10 + $0xd0] sm:$0xff]
        %v1408 = vld [vmem:[#allocation10 + $0xd8] sm:$0xff]
        %v1409 = vld [vmem:[#allocation10 + $0xe0] sm:$0xff]
        %v1410 = vld [vmem:[#allocation10 + $0xe8] sm:$0xff]
        %v1411 = vld [vmem:[#allocation10 + $0xf0] sm:$0xff]
        %v1412 = vld [vmem:[#allocation10 + $0xf8] sm:$0xff]
        %v1413 = vld [vmem:[#allocation10 + $0x100] sm:$0xff]
        %v1414 = vld [vmem:[#allocation10 + $0x108] sm:$0xff]
        %v1415 = vld [vmem:[#allocation10 + $0x110] sm:$0xff]
        %v1416 = vld [vmem:[#allocation10 + $0x118] sm:$0xff]
        %v1417 = vld [vmem:[#allocation10 + $0x120] sm:$0xff]
        %v1418 = vld [vmem:[#allocation10 + $0x128] sm:$0xff]
        %v1419 = vld [vmem:[#allocation10 + $0x130] sm:$0xff]
        %v1420 = vld [vmem:[#allocation10 + $0x138] sm:$0xff]
        %v1421 = vld [vmem:[#allocation10 + $0x140] sm:$0xff]
        %v1422 = vld [vmem:[#allocation10 + $0x148] sm:$0xff]
        %v1423 = vld [vmem:[#allocation10 + $0x150] sm:$0xff]
        %v1424 = vld [vmem:[#allocation10 + $0x158] sm:$0xff]
        %v1425 = vld [vmem:[#allocation10 + $0x160] sm:$0xff]
        %v1426 = vld [vmem:[#allocation10 + $0x168] sm:$0xff]
        %v1427 = vld [vmem:[#allocation10 + $0x170] sm:$0xff]
        %v1428 = vld [vmem:[#allocation10 + $0x178] sm:$0xff]
        %v1429 = vld [vmem:[#allocation10 + $0x180] sm:$0xff]
        %v1430 = vld [vmem:[#allocation10 + $0x188] sm:$0xff]
        %v1431 = vld [vmem:[#allocation10 + $0x190] sm:$0xff]
        %v1432 = vld [vmem:[#allocation10 + $0x198] sm:$0xff]
        %v1433 = vld [vmem:[#allocation10 + $0x1a0] sm:$0xff]
        %v1434 = vld [vmem:[#allocation10 + $0x1a8] sm:$0xff]
        %v1435 = vld [vmem:[#allocation10 + $0x1b0] sm:$0xff]
        %v1436 = vld [vmem:[#allocation10 + $0x1b8] sm:$0xff]
        %v1437 = vld [vmem:[#allocation10 + $0x1c0] sm:$0xff]
        %v1438 = vld [vmem:[#allocation10 + $0x1c8] sm:$0xff]
        %v1439 = vld [vmem:[#allocation10 + $0x1d0] sm:$0xff]
        %v1440 = vld [vmem:[#allocation10 + $0x1d8] sm:$0xff]
        %v1441 = vld [vmem:[#allocation10 + $0x1e0] sm:$0xff]
        %v1442 = vld [vmem:[#allocation10 + $0x1e8] sm:$0xff]
        %v1443 = vld [vmem:[#allocation10 + $0x1f0] sm:$0xff]
        %v1444 = vld [vmem:[#allocation10 + $0x1f8] sm:$0xff]
        %v1445 = vld [vmem:[#allocation10 + $0x200] sm:$0xff]
        %v1446 = vld [vmem:[#allocation10 + $0x208] sm:$0xff]
        %v1447 = vld [vmem:[#allocation10 + $0x210] sm:$0xff]
        %v1448 = vld [vmem:[#allocation10 + $0x218] sm:$0xff]
        %v1449 = vld [vmem:[#allocation10 + $0x220] sm:$0xff]
        %v1450 = vld [vmem:[#allocation10 + $0x228] sm:$0xff]
        %v1451 = vld [vmem:[#allocation10 + $0x230] sm:$0xff]
        %v1452 = vld [vmem:[#allocation10 + $0x238] sm:$0xff]
        %v1453 = vld [vmem:[#allocation10 + $0x240] sm:$0xff]
        %v1454 = vld [vmem:[#allocation10 + $0x248] sm:$0xff]
        %v1455 = vld [vmem:[#allocation10 + $0x250] sm:$0xff]
        %v1456 = vld [vmem:[#allocation10 + $0x258] sm:$0xff]
        %v1457 = vld [vmem:[#allocation10 + $0x260] sm:$0xff]
        %v1458 = vld [vmem:[#allocation10 + $0x268] sm:$0xff]
        %v1459 = vld [vmem:[#allocation10 + $0x270] sm:$0xff]
        %v1460 = vld [vmem:[#allocation10 + $0x278] sm:$0xff]
        %v1461 = vld [vmem:[#allocation10 + $0x280] sm:$0xff]
        %v1462 = vld [vmem:[#allocation10 + $0x288] sm:$0xff]
        %v1463 = vld [vmem:[#allocation10 + $0x290] sm:$0xff]
        %v1464 = vld [vmem:[#allocation10 + $0x298] sm:$0xff]
        %v1465 = vld [vmem:[#allocation10 + $0x2a0] sm:$0xff]
        %v1466 = vld [vmem:[#allocation10 + $0x2a8] sm:$0xff]
        %v1467 = vld [vmem:[#allocation10 + $0x2b0] sm:$0xff]
        %v1468 = vld [vmem:[#allocation10 + $0x2b8] sm:$0xff]
        %v1469 = vld [vmem:[#allocation10 + $0x2c0] sm:$0xff]
        %v1470 = vld [vmem:[#allocation10 + $0x2c8] sm:$0xff]
        %v1471 = vld [vmem:[#allocation10 + $0x2d0] sm:$0xff]
        %v1472 = vld [vmem:[#allocation10 + $0x2d8] sm:$0xff]
        %v1473 = vld [vmem:[#allocation10 + $0x2e0] sm:$0xff]
        %v1474 = vld [vmem:[#allocation10 + $0x2e8] sm:$0xff]
        %v1475 = vld [vmem:[#allocation10 + $0x2f0] sm:$0xff]
        %v1476 = vld [vmem:[#allocation10 + $0x2f8] sm:$0xff]
        %v1477 = vld [vmem:[#allocation10 + $0x300] sm:$0xff]
        %v1478 = vld [vmem:[#allocation10 + $0x308] sm:$0xff]
        %v1479 = vld [vmem:[#allocation10 + $0x310] sm:$0xff]
        %v1480 = vld [vmem:[#allocation10 + $0x318] sm:$0xff]
        %v1481 = vld [vmem:[#allocation10 + $0x320] sm:$0xff]
        %v1482 = vld [vmem:[#allocation10 + $0x328] sm:$0xff]
        %v1483 = vld [vmem:[#allocation10 + $0x330] sm:$0xff]
        %v1484 = vld [vmem:[#allocation10 + $0x338] sm:$0xff]
        %v1485 = vld [vmem:[#allocation10 + $0x340] sm:$0xff]
        %v1486 = vld [vmem:[#allocation10 + $0x348] sm:$0xff]
        %v1487 = vld [vmem:[#allocation10 + $0x350] sm:$0xff]
        %v1488 = vld [vmem:[#allocation10 + $0x358] sm:$0xff]
        %v1489 = vld [vmem:[#allocation10 + $0x360] sm:$0xff]
        %v1490 = vld [vmem:[#allocation10 + $0x368] sm:$0xff]
        %v1491 = vld [vmem:[#allocation10 + $0x370] sm:$0xff]
        %v1492 = vld [vmem:[#allocation10 + $0x378] sm:$0xff]
        %v1493 = vld [vmem:[#allocation10 + $0x380] sm:$0xff]
        %v1494 = vld [vmem:[#allocation10 + $0x388] sm:$0xff]
        %v1495 = vld [vmem:[#allocation10 + $0x390] sm:$0xff]
        %v1496 = vld [vmem:[#allocation10 + $0x398] sm:$0xff]
        %v1497 = vld [vmem:[#allocation10 + $0x3a0] sm:$0xff]
        %v1498 = vld [vmem:[#allocation10 + $0x3a8] sm:$0xff]
        %v1499 = vld [vmem:[#allocation10 + $0x3b0] sm:$0xff]
        %v1500 = vld [vmem:[#allocation10 + $0x3b8] sm:$0xff]
        %v1501 = vld [vmem:[#allocation10 + $0x3c0] sm:$0xff]
        %v1502 = vld [vmem:[#allocation10 + $0x3c8] sm:$0xff]
        %v1503 = vld [vmem:[#allocation10 + $0x3d0] sm:$0xff]
        %v1504 = vld [vmem:[#allocation10 + $0x3d8] sm:$0xff]
        %v1505 = vld [vmem:[#allocation10 + $0x3e0] sm:$0xff]
        %v1506 = vld [vmem:[#allocation10 + $0x3e8] sm:$0xff]
        %v1507 = vld [vmem:[#allocation10 + $0x3f0] sm:$0xff]
        %v1508 = vld [vmem:[#allocation10 + $0x3f8] sm:$0xff]
        %v1509 = vld [vmem:[#allocation10 + $0x400] sm:$0xff]
        %v1510 = vld [vmem:[#allocation10 + $0x408] sm:$0xff]
        %v1511 = vld [vmem:[#allocation10 + $0x410] sm:$0xff]
        %v1512 = vld [vmem:[#allocation10 + $0x418] sm:$0xff]
        %v1513 = vld [vmem:[#allocation10 + $0x420] sm:$0xff]
        %v1514 = vld [vmem:[#allocation10 + $0x428] sm:$0xff]
        %v1515 = vld [vmem:[#allocation10 + $0x430] sm:$0xff]
        %v1516 = vld [vmem:[#allocation10 + $0x438] sm:$0xff]
        %v1517 = vld [vmem:[#allocation10 + $0x440] sm:$0xff]
        %v1518 = vld [vmem:[#allocation10 + $0x448] sm:$0xff]
        %v1519 = vld [vmem:[#allocation10 + $0x450] sm:$0xff]
        %v1520 = vld [vmem:[#allocation10 + $0x458] sm:$0xff]
        %v1521 = vld [vmem:[#allocation10 + $0x460] sm:$0xff]
        %v1522 = vld [vmem:[#allocation10 + $0x468] sm:$0xff]
        %v1523 = vld [vmem:[#allocation10 + $0x470] sm:$0xff]
        %v1524 = vld [vmem:[#allocation10 + $0x478] sm:$0xff]
        %v1525 = vld [vmem:[#allocation10 + $0x480] sm:$0xff]
        %v1526 = vld [vmem:[#allocation10 + $0x488] sm:$0xff]
        %v1527 = vld [vmem:[#allocation10 + $0x490] sm:$0xff]
        %v1528 = vld [vmem:[#allocation10 + $0x498] sm:$0xff]
        %v1529 = vld [vmem:[#allocation10 + $0x4a0] sm:$0xff]
        %v1530 = vld [vmem:[#allocation10 + $0x4a8] sm:$0xff]
        %v1531 = vld [vmem:[#allocation10 + $0x4b0] sm:$0xff]
        %v1532 = vld [vmem:[#allocation10 + $0x4b8] sm:$0xff]
        %v1533 = vld [vmem:[#allocation10 + $0x4c0] sm:$0xff]
        %v1534 = vld [vmem:[#allocation10 + $0x4c8] sm:$0xff]
        %v1535 = vld [vmem:[#allocation10 + $0x4d0] sm:$0xff]
        %v1536 = vld [vmem:[#allocation10 + $0x4d8] sm:$0xff]
        %v1537 = vld [vmem:[#allocation10 + $0x4e0] sm:$0xff]
        %v1538 = vld [vmem:[#allocation10 + $0x4e8] sm:$0xff]
        %v1539 = vld [vmem:[#allocation10 + $0x4f0] sm:$0xff]
        %v1540 = vld [vmem:[#allocation10 + $0x4f8] sm:$0xff]
        %v1541 = vld [vmem:[#allocation10 + $0x500] sm:$0xff]
        %v1542 = vld [vmem:[#allocation10 + $0x508] sm:$0xff]
        %v1543 = vld [vmem:[#allocation10 + $0x510] sm:$0xff]
        %v1544 = vld [vmem:[#allocation10 + $0x518] sm:$0xff]
        %v1545 = vld [vmem:[#allocation10 + $0x520] sm:$0xff]
        %v1546 = vld [vmem:[#allocation10 + $0x528] sm:$0xff]
        %v1547 = vld [vmem:[#allocation10 + $0x530] sm:$0xff]
        %v1548 = vld [vmem:[#allocation10 + $0x538] sm:$0xff]
        %v1549 = vld [vmem:[#allocation10 + $0x540] sm:$0xff]
        %v1550 = vld [vmem:[#allocation10 + $0x548] sm:$0xff]
        %v1551 = vld [vmem:[#allocation10 + $0x550] sm:$0xff]
        %v1552 = vld [vmem:[#allocation10 + $0x558] sm:$0xff]
        %v1553 = vld [vmem:[#allocation10 + $0x560] sm:$0xff]
        %v1554 = vld [vmem:[#allocation10 + $0x568] sm:$0xff]
        %v1555 = vld [vmem:[#allocation10 + $0x570] sm:$0xff]
        %v1556 = vld [vmem:[#allocation10 + $0x578] sm:$0xff]
        %v1557 = vld [vmem:[#allocation10 + $0x580] sm:$0xff]
        %v1558 = vld [vmem:[#allocation10 + $0x588] sm:$0xff]
        %v1559 = vld [vmem:[#allocation10 + $0x590] sm:$0xff]
        %v1560 = vld [vmem:[#allocation10 + $0x598] sm:$0xff]
        %v1561 = vld [vmem:[#allocation10 + $0x5a0] sm:$0xff]
        %v1562 = vld [vmem:[#allocation10 + $0x5a8] sm:$0xff]
        %v1563 = vld [vmem:[#allocation10 + $0x5b0] sm:$0xff]
        %v1564 = vld [vmem:[#allocation10 + $0x5b8] sm:$0xff]
        %v1565 = vld [vmem:[#allocation10 + $0x5c0] sm:$0xff]
        %v1566 = vld [vmem:[#allocation10 + $0x5c8] sm:$0xff]
        %v1567 = vld [vmem:[#allocation10 + $0x5d0] sm:$0xff]
        %v1568 = vld [vmem:[#allocation10 + $0x5d8] sm:$0xff]
        %v1569 = vld [vmem:[#allocation10 + $0x5e0] sm:$0xff]
        %v1570 = vld [vmem:[#allocation10 + $0x5e8] sm:$0xff]
        %v1571 = vld [vmem:[#allocation10 + $0x5f0] sm:$0xff]
        %v1572 = vld [vmem:[#allocation10 + $0x5f8] sm:$0xff]
        %v1573 = vld [vmem:[#allocation10 + $0x600] sm:$0xff]
        %v1574 = vld [vmem:[#allocation10 + $0x608] sm:$0xff]
        %v1575 = vld [vmem:[#allocation10 + $0x610] sm:$0xff]
        %v1576 = vld [vmem:[#allocation10 + $0x618] sm:$0xff]
        %v1577 = vld [vmem:[#allocation10 + $0x620] sm:$0xff]
        %v1578 = vld [vmem:[#allocation10 + $0x628] sm:$0xff]
        %v1579 = vld [vmem:[#allocation10 + $0x630] sm:$0xff]
        %v1580 = vld [vmem:[#allocation10 + $0x638] sm:$0xff]
        %v1581 = vld [vmem:[#allocation10 + $0x640] sm:$0xff]
        %v1582 = vld [vmem:[#allocation10 + $0x648] sm:$0xff]
        %v1583 = vld [vmem:[#allocation10 + $0x650] sm:$0xff]
        %v1584 = vld [vmem:[#allocation10 + $0x658] sm:$0xff]
        %v1585 = vld [vmem:[#allocation10 + $0x660] sm:$0xff]
        %v1586 = vld [vmem:[#allocation10 + $0x668] sm:$0xff]
        %v1587 = vld [vmem:[#allocation10 + $0x670] sm:$0xff]
        %v1588 = vld [vmem:[#allocation10 + $0x678] sm:$0xff]
        %v1589 = vld [vmem:[#allocation10 + $0x680] sm:$0xff]
        %v1590 = vld [vmem:[#allocation10 + $0x688] sm:$0xff]
        %v1591 = vld [vmem:[#allocation10 + $0x690] sm:$0xff]
        %v1592 = vld [vmem:[#allocation10 + $0x698] sm:$0xff]
        %v1593 = vld [vmem:[#allocation10 + $0x6a0] sm:$0xff]
        %v1594 = vld [vmem:[#allocation10 + $0x6a8] sm:$0xff]
        %v1595 = vld [vmem:[#allocation10 + $0x6b0] sm:$0xff]
        %v1596 = vld [vmem:[#allocation10 + $0x6b8] sm:$0xff]
        %v1597 = vld [vmem:[#allocation10 + $0x6c0] sm:$0xff]
        %v1598 = vld [vmem:[#allocation10 + $0x6c8] sm:$0xff]
        %v1599 = vld [vmem:[#allocation10 + $0x6d0] sm:$0xff]
        %v1600 = vld [vmem:[#allocation10 + $0x6d8] sm:$0xff]
        %v1601 = vld [vmem:[#allocation10 + $0x6e0] sm:$0xff]
        %v1602 = vld [vmem:[#allocation10 + $0x6e8] sm:$0xff]
        %v1603 = vld [vmem:[#allocation10 + $0x6f0] sm:$0xff]
        %v1604 = vld [vmem:[#allocation10 + $0x6f8] sm:$0xff]
        %v1605 = vld [vmem:[#allocation10 + $0x700] sm:$0xff]
        %v1606 = vld [vmem:[#allocation10 + $0x708] sm:$0xff]
        %v1607 = vld [vmem:[#allocation10 + $0x710] sm:$0xff]
        %v1608 = vld [vmem:[#allocation10 + $0x718] sm:$0xff]
        %v1609 = vld [vmem:[#allocation10 + $0x720] sm:$0xff]
        %v1610 = vld [vmem:[#allocation10 + $0x728] sm:$0xff]
        %v1611 = vld [vmem:[#allocation10 + $0x730] sm:$0xff]
        %v1612 = vld [vmem:[#allocation10 + $0x738] sm:$0xff]
        %v1613 = vld [vmem:[#allocation10 + $0x740] sm:$0xff]
        %v1614 = vld [vmem:[#allocation10 + $0x748] sm:$0xff]
        %v1615 = vld [vmem:[#allocation10 + $0x750] sm:$0xff]
        %v1616 = vld [vmem:[#allocation10 + $0x758] sm:$0xff]
        %v1617 = vld [vmem:[#allocation10 + $0x760] sm:$0xff]
        %v1618 = vld [vmem:[#allocation10 + $0x768] sm:$0xff]
        %v1619 = vld [vmem:[#allocation10 + $0x770] sm:$0xff]
        %v1620 = vld [vmem:[#allocation10 + $0x778] sm:$0xff]
        %v1621 = vld [vmem:[#allocation10 + $0x780] sm:$0xff]
        %v1622 = vld [vmem:[#allocation10 + $0x788] sm:$0xff]
        %v1623 = vld [vmem:[#allocation10 + $0x790] sm:$0xff]
        %v1624 = vld [vmem:[#allocation10 + $0x798] sm:$0xff]
        %v1625 = vld [vmem:[#allocation10 + $0x7a0] sm:$0xff]
        %v1626 = vld [vmem:[#allocation10 + $0x7a8] sm:$0xff]
        %v1627 = vld [vmem:[#allocation10 + $0x7b0] sm:$0xff]
        %v1628 = vld [vmem:[#allocation10 + $0x7b8] sm:$0xff]
        %v1629 = vld [vmem:[#allocation10 + $0x7c0] sm:$0xff]
        %v1630 = vld [vmem:[#allocation10 + $0x7c8] sm:$0xff]
        %v1631 = vld [vmem:[#allocation10 + $0x7d0] sm:$0xff]
        %v1632 = vld [vmem:[#allocation10 + $0x7d8] sm:$0xff]
        %v1633 = vld [vmem:[#allocation10 + $0x7e0] sm:$0xff]
        %v1634 = vld [vmem:[#allocation10 + $0x7e8] sm:$0xff]
        %v1635 = vld [vmem:[#allocation10 + $0x7f0] sm:$0xff]
        %v1636 = vld [vmem:[#allocation10 + $0x7f8] sm:$0xff]
        %v1637 = vld [vmem:[#allocation12] sm:$0xf]
        %v1639 = vlaneseq
        %v1640 = vshrl.u32 %v1639, 7
        %v1641 = vsub.s32 0, %v1640
        %v1642 = vrot.slane %v1637, %v1641
        %v1643 = vlaneseq
        %v1644 = vshrl.u32 %v1643, 7
        %v1645 = vsub.s32 1, %v1644
        %v1646 = vrot.slane %v1637, %v1645
        %v1647 = vlaneseq
        %v1648 = vshrl.u32 %v1647, 7
        %v1649 = vsub.s32 2, %v1648
        %v1650 = vrot.slane %v1637, %v1649
        %v1651 = vlaneseq
        %v1652 = vshrl.u32 %v1651, 7
        %v1653 = vsub.s32 3, %v1652
        %v1654 = vrot.slane %v1637, %v1653
        %1659 = vmatprep.subr.mxu0 %v1382
        %1660 = vmatpush1.msra.mxu0 %v1381
        %1661 = vmatprep.subr.mxu0 %v1386
        %1662 = vmatpush1.msra.mxu0 %v1385
        %1663 = vmatprep.subr.mxu0 %v1390
        %1664 = vmatpush1.msra.mxu0 %v1389
        %1665 = vmatprep.subr.mxu0 %v1394
        %1666 = vmatpush1.msra.mxu0 %v1393
        %1667 = vmatprep.subr.mxu0 %v1398
        %1668 = vmatpush1.msra.mxu0 %v1397
        %1669 = vmatprep.subr.mxu0 %v1402
        %1670 = vmatpush1.msra.mxu0 %v1401
        %1671 = vmatprep.subr.mxu0 %v1406
        %1672 = vmatpush1.msra.mxu0 %v1405
        %1673 = vmatprep.subr.mxu0 %v1410
        %1674 = vmatpush1.msra.mxu0 %v1409
        %1675 = vmatprep.subr.mxu0 %v1414
        %1676 = vmatpush1.msra.mxu0 %v1413
        %1677 = vmatprep.subr.mxu0 %v1418
        %1678 = vmatpush1.msra.mxu0 %v1417
        %1679 = vmatprep.subr.mxu0 %v1422
        %1680 = vmatpush1.msra.mxu0 %v1421
        %1681 = vmatprep.subr.mxu0 %v1426
        %1682 = vmatpush1.msra.mxu0 %v1425
        %1683 = vmatprep.subr.mxu0 %v1430
        %1684 = vmatpush1.msra.mxu0 %v1429
        %1685 = vmatprep.subr.mxu0 %v1434
        %1686 = vmatpush1.msra.mxu0 %v1433
        %1687 = vmatprep.subr.mxu0 %v1438
        %1688 = vmatpush1.msra.mxu0 %v1437
        %1689 = vmatprep.subr.mxu0 %v1442
        %1690 = vmatpush1.msra.mxu0 %v1441
        %1691 = vmatprep.subr.mxu0 %v1446
        %1692 = vmatpush1.msra.mxu0 %v1445
        %1693 = vmatprep.subr.mxu0 %v1450
        %1694 = vmatpush1.msra.mxu0 %v1449
        %1695 = vmatprep.subr.mxu0 %v1454
        %1696 = vmatpush1.msra.mxu0 %v1453
        %1697 = vmatprep.subr.mxu0 %v1458
        %1698 = vmatpush1.msra.mxu0 %v1457
        %1699 = vmatprep.subr.mxu0 %v1462
        %1700 = vmatpush1.msra.mxu0 %v1461
        %1701 = vmatprep.subr.mxu0 %v1466
        %1702 = vmatpush1.msra.mxu0 %v1465
        %1703 = vmatprep.subr.mxu0 %v1470
        %1704 = vmatpush1.msra.mxu0 %v1469
        %1705 = vmatprep.subr.mxu0 %v1474
        %1706 = vmatpush1.msra.mxu0 %v1473
        %1707 = vmatprep.subr.mxu0 %v1478
        %1708 = vmatpush1.msra.mxu0 %v1477
        %1709 = vmatprep.subr.mxu0 %v1482
        %1710 = vmatpush1.msra.mxu0 %v1481
        %1711 = vmatprep.subr.mxu0 %v1486
        %1712 = vmatpush1.msra.mxu0 %v1485
        %1713 = vmatprep.subr.mxu0 %v1490
        %1714 = vmatpush1.msra.mxu0 %v1489
        %1715 = vmatprep.subr.mxu0 %v1494
        %1716 = vmatpush1.msra.mxu0 %v1493
        %1717 = vmatprep.subr.mxu0 %v1498
        %1718 = vmatpush1.msra.mxu0 %v1497
        %1719 = vmatprep.subr.mxu0 %v1502
        %1720 = vmatpush1.msra.mxu0 %v1501
        %1721 = vmatprep.subr.mxu0 %v1506
        %1722 = vmatpush1.msra.mxu0 %v1505
        %1723 = vmatprep.mubr.f32.mxu0 %v1378
        %1724 = vmatmul.mubr.f32.gmra.mrb[0].mxu0 %v1377
        %v1725 = vpop.f32.mrb[0].mxu0
        %v1726 = vadd.f32 %v1642, %v1725
        %v1727 = vpop.f32.mrb[0].mxu0
        %v1728 = vadd.f32 %v1646, %v1727
        %1729 = vdwg.mxu0
        %1730 = vmatprep.subr.mxu0 %v1510
        %1731 = vmatpush1.msra.mxu0 %v1509
        %1732 = vmatprep.subr.mxu0 %v1514
        %1733 = vmatpush1.msra.mxu0 %v1513
        %1734 = vmatprep.subr.mxu0 %v1518
        %1735 = vmatpush1.msra.mxu0 %v1517
        %1736 = vmatprep.subr.mxu0 %v1522
        %1737 = vmatpush1.msra.mxu0 %v1521
        %1738 = vmatprep.subr.mxu0 %v1526
        %1739 = vmatpush1.msra.mxu0 %v1525
        %1740 = vmatprep.subr.mxu0 %v1530
        %1741 = vmatpush1.msra.mxu0 %v1529
        %1742 = vmatprep.subr.mxu0 %v1534
        %1743 = vmatpush1.msra.mxu0 %v1533
        %1744 = vmatprep.subr.mxu0 %v1538
        %1745 = vmatpush1.msra.mxu0 %v1537
        %1746 = vmatprep.subr.mxu0 %v1542
        %1747 = vmatpush1.msra.mxu0 %v1541
        %1748 = vmatprep.subr.mxu0 %v1546
        %1749 = vmatpush1.msra.mxu0 %v1545
        %1750 = vmatprep.subr.mxu0 %v1550
        %1751 = vmatpush1.msra.mxu0 %v1549
        %1752 = vmatprep.subr.mxu0 %v1554
        %1753 = vmatpush1.msra.mxu0 %v1553
        %1754 = vmatprep.subr.mxu0 %v1558
        %1755 = vmatpush1.msra.mxu0 %v1557
        %1756 = vmatprep.subr.mxu0 %v1562
        %1757 = vmatpush1.msra.mxu0 %v1561
        %1758 = vmatprep.subr.mxu0 %v1566
        %1759 = vmatpush1.msra.mxu0 %v1565
        %1760 = vmatprep.subr.mxu0 %v1570
        %1761 = vmatpush1.msra.mxu0 %v1569
        %1762 = vmatprep.subr.mxu0 %v1574
        %1763 = vmatpush1.msra.mxu0 %v1573
        %1764 = vmatprep.subr.mxu0 %v1578
        %1765 = vmatpush1.msra.mxu0 %v1577
        %1766 = vmatprep.subr.mxu0 %v1582
        %1767 = vmatpush1.msra.mxu0 %v1581
        %1768 = vmatprep.subr.mxu0 %v1586
        %1769 = vmatpush1.msra.mxu0 %v1585
        %1770 = vmatprep.subr.mxu0 %v1590
        %1771 = vmatpush1.msra.mxu0 %v1589
        %1772 = vmatprep.subr.mxu0 %v1594
        %1773 = vmatpush1.msra.mxu0 %v1593
        %1774 = vmatprep.subr.mxu0 %v1598
        %1775 = vmatpush1.msra.mxu0 %v1597
        %1776 = vmatprep.subr.mxu0 %v1602
        %1777 = vmatpush1.msra.mxu0 %v1601
        %1778 = vmatprep.subr.mxu0 %v1606
        %1779 = vmatpush1.msra.mxu0 %v1605
        %1780 = vmatprep.subr.mxu0 %v1610
        %1781 = vmatpush1.msra.mxu0 %v1609
        %1782 = vmatprep.subr.mxu0 %v1614
        %1783 = vmatpush1.msra.mxu0 %v1613
        %1784 = vmatprep.subr.mxu0 %v1618
        %1785 = vmatpush1.msra.mxu0 %v1617
        %1786 = vmatprep.subr.mxu0 %v1622
        %1787 = vmatpush1.msra.mxu0 %v1621
        %1788 = vmatprep.subr.mxu0 %v1626
        %1789 = vmatpush1.msra.mxu0 %v1625
        %1790 = vmatprep.subr.mxu0 %v1630
        %1791 = vmatpush1.msra.mxu0 %v1629
        %1792 = vmatprep.subr.mxu0 %v1634
        %1793 = vmatpush1.msra.mxu0 %v1633
        %1794 = vmatprep.mubr.f32.mxu0 %v1380
        %1795 = vmatmul.mubr.f32.gmra.mrb[0].mxu0 %v1379
        %v1796 = vpop.f32.mrb[0].mxu0
        %v1797 = vadd.f32 %v1726, %v1796
        %v1798 = vpop.f32.mrb[0].mxu0
        %v1799 = vadd.f32 %v1728, %v1798
        %1800 = vdwg.mxu0
        %1801 = vmatprep.subr.mxu0 %v1384
        %1802 = vmatpush1.msra.mxu0 %v1383
        %1803 = vmatprep.subr.mxu0 %v1388
        %1804 = vmatpush1.msra.mxu0 %v1387
        %1805 = vmatprep.subr.mxu0 %v1392
        %1806 = vmatpush1.msra.mxu0 %v1391
        %1807 = vmatprep.subr.mxu0 %v1396
        %1808 = vmatpush1.msra.mxu0 %v1395
        %1809 = vmatprep.subr.mxu0 %v1400
        %1810 = vmatpush1.msra.mxu0 %v1399
        %1811 = vmatprep.subr.mxu0 %v1404
        %1812 = vmatpush1.msra.mxu0 %v1403
        %1813 = vmatprep.subr.mxu0 %v1408
        %1814 = vmatpush1.msra.mxu0 %v1407
        %1815 = vmatprep.subr.mxu0 %v1412
        %1816 = vmatpush1.msra.mxu0 %v1411
        %1817 = vmatprep.subr.mxu0 %v1416
        %1818 = vmatpush1.msra.mxu0 %v1415
        %1819 = vmatprep.subr.mxu0 %v1420
        %1820 = vmatpush1.msra.mxu0 %v1419
        %1821 = vmatprep.subr.mxu0 %v1424
        %1822 = vmatpush1.msra.mxu0 %v1423
        %1823 = vmatprep.subr.mxu0 %v1428
        %1824 = vmatpush1.msra.mxu0 %v1427
        %1825 = vmatprep.subr.mxu0 %v1432
        %1826 = vmatpush1.msra.mxu0 %v1431
        %1827 = vmatprep.subr.mxu0 %v1436
        %1828 = vmatpush1.msra.mxu0 %v1435
        %1829 = vmatprep.subr.mxu0 %v1440
        %1830 = vmatpush1.msra.mxu0 %v1439
        %1831 = vmatprep.subr.mxu0 %v1444
        %1832 = vmatpush1.msra.mxu0 %v1443
        %1833 = vmatprep.subr.mxu0 %v1448
        %1834 = vmatpush1.msra.mxu0 %v1447
        %1835 = vmatprep.subr.mxu0 %v1452
        %1836 = vmatpush1.msra.mxu0 %v1451
        %1837 = vmatprep.subr.mxu0 %v1456
        %1838 = vmatpush1.msra.mxu0 %v1455
        %1839 = vmatprep.subr.mxu0 %v1460
        %1840 = vmatpush1.msra.mxu0 %v1459
        %1841 = vmatprep.subr.mxu0 %v1464
        %1842 = vmatpush1.msra.mxu0 %v1463
        %1843 = vmatprep.subr.mxu0 %v1468
        %1844 = vmatpush1.msra.mxu0 %v1467
        %1845 = vmatprep.subr.mxu0 %v1472
        %1846 = vmatpush1.msra.mxu0 %v1471
        %1847 = vmatprep.subr.mxu0 %v1476
        %1848 = vmatpush1.msra.mxu0 %v1475
        %1849 = vmatprep.subr.mxu0 %v1480
        %1850 = vmatpush1.msra.mxu0 %v1479
        %1851 = vmatprep.subr.mxu0 %v1484
        %1852 = vmatpush1.msra.mxu0 %v1483
        %1853 = vmatprep.subr.mxu0 %v1488
        %1854 = vmatpush1.msra.mxu0 %v1487
        %1855 = vmatprep.subr.mxu0 %v1492
        %1856 = vmatpush1.msra.mxu0 %v1491
        %1857 = vmatprep.subr.mxu0 %v1496
        %1858 = vmatpush1.msra.mxu0 %v1495
        %1859 = vmatprep.subr.mxu0 %v1500
        %1860 = vmatpush1.msra.mxu0 %v1499
        %1861 = vmatprep.subr.mxu0 %v1504
        %1862 = vmatpush1.msra.mxu0 %v1503
        %1863 = vmatprep.subr.mxu0 %v1508
        %1864 = vmatpush1.msra.mxu0 %v1507
        %1865 = vmatprep.mubr.f32.mxu0 %v1378
        %1866 = vmatmul.mubr.f32.gmra.mrb[0].mxu0 %v1377
        %v1867 = vpop.f32.mrb[0].mxu0
        %v1868 = vadd.f32 %v1650, %v1867
        %v1869 = vpop.f32.mrb[0].mxu0
        %v1870 = vadd.f32 %v1654, %v1869
        %1871 = vdwg.mxu0
        %1872 = vmatprep.subr.mxu0 %v1512
        %1873 = vmatpush1.msra.mxu0 %v1511
        %1874 = vmatprep.subr.mxu0 %v1516
        %1875 = vmatpush1.msra.mxu0 %v1515
        %1876 = vmatprep.subr.mxu0 %v1520
        %1877 = vmatpush1.msra.mxu0 %v1519
        %1878 = vmatprep.subr.mxu0 %v1524
        %1879 = vmatpush1.msra.mxu0 %v1523
        %1880 = vmatprep.subr.mxu0 %v1528
        %1881 = vmatpush1.msra.mxu0 %v1527
        %1882 = vmatprep.subr.mxu0 %v1532
        %1883 = vmatpush1.msra.mxu0 %v1531
        %1884 = vmatprep.subr.mxu0 %v1536
        %1885 = vmatpush1.msra.mxu0 %v1535
        %1886 = vmatprep.subr.mxu0 %v1540
        %1887 = vmatpush1.msra.mxu0 %v1539
        %1888 = vmatprep.subr.mxu0 %v1544
        %1889 = vmatpush1.msra.mxu0 %v1543
        %1890 = vmatprep.subr.mxu0 %v1548
        %1891 = vmatpush1.msra.mxu0 %v1547
        %1892 = vmatprep.subr.mxu0 %v1552
        %1893 = vmatpush1.msra.mxu0 %v1551
        %1894 = vmatprep.subr.mxu0 %v1556
        %1895 = vmatpush1.msra.mxu0 %v1555
        %1896 = vmatprep.subr.mxu0 %v1560
        %1897 = vmatpush1.msra.mxu0 %v1559
        %1898 = vmatprep.subr.mxu0 %v1564
        %1899 = vmatpush1.msra.mxu0 %v1563
        %1900 = vmatprep.subr.mxu0 %v1568
        %1901 = vmatpush1.msra.mxu0 %v1567
        %1902 = vmatprep.subr.mxu0 %v1572
        %1903 = vmatpush1.msra.mxu0 %v1571
        %1904 = vmatprep.subr.mxu0 %v1576
        %1905 = vmatpush1.msra.mxu0 %v1575
        %1906 = vmatprep.subr.mxu0 %v1580
        %1907 = vmatpush1.msra.mxu0 %v1579
        %1908 = vmatprep.subr.mxu0 %v1584
        %1909 = vmatpush1.msra.mxu0 %v1583
        %1910 = vmatprep.subr.mxu0 %v1588
        %1911 = vmatpush1.msra.mxu0 %v1587
        %1912 = vmatprep.subr.mxu0 %v1592
        %1913 = vmatpush1.msra.mxu0 %v1591
        %1914 = vmatprep.subr.mxu0 %v1596
        %1915 = vmatpush1.msra.mxu0 %v1595
        %1916 = vmatprep.subr.mxu0 %v1600
        %1917 = vmatpush1.msra.mxu0 %v1599
        %1918 = vmatprep.subr.mxu0 %v1604
        %1919 = vmatpush1.msra.mxu0 %v1603
        %1920 = vmatprep.subr.mxu0 %v1608
        %1921 = vmatpush1.msra.mxu0 %v1607
        %1922 = vmatprep.subr.mxu0 %v1612
        %1923 = vmatpush1.msra.mxu0 %v1611
        %1924 = vmatprep.subr.mxu0 %v1616
        %1925 = vmatpush1.msra.mxu0 %v1615
        %1926 = vmatprep.subr.mxu0 %v1620
        %1927 = vmatpush1.msra.mxu0 %v1619
        %1928 = vmatprep.subr.mxu0 %v1624
        %1929 = vmatpush1.msra.mxu0 %v1623
        %1930 = vmatprep.subr.mxu0 %v1628
        %1931 = vmatpush1.msra.mxu0 %v1627
        %1932 = vmatprep.subr.mxu0 %v1632
        %1933 = vmatpush1.msra.mxu0 %v1631
        %1934 = vmatprep.subr.mxu0 %v1636
        %1935 = vmatpush1.msra.mxu0 %v1635
        %1936 = vmatprep.mubr.f32.mxu0 %v1380
        %1937 = vmatmul.mubr.f32.gmra.mrb[0].mxu0 %v1379
        %v1938 = vpop.f32.mrb[0].mxu0
        %v1939 = vadd.f32 %v1868, %v1938
        %v1940 = vpop.f32.mrb[0].mxu0
        %v1941 = vadd.f32 %v1870, %v1940
        %1942 = vdwg.mxu0
        %v1943 = vmax.f32 %v1797, 0.0
        %v1944 = vmax.f32 %v1799, 0.0
        %v1945 = vmax.f32 %v1939, 0.0
        %v1946 = vmax.f32 %v1941, 0.0
        %1947 = vst [vmem:[#allocation3] sm:$0xff] %v1943
        %1948 = vst [vmem:[#allocation3 + $0x8] sm:$0xff] %v1944
        %1949 = vst [vmem:[#allocation3 + $0x10] sm:$0xff] %v1945
        %1950 = vst [vmem:[#allocation3 + $0x18] sm:$0xff] %v1946
        %v1951 = vld [vmem:[#allocation3] sm:$0xff]
        %v1952 = vld [vmem:[#allocation3 + $0x8] sm:$0xff]
        %v1953 = vld [vmem:[#allocation3 + $0x10] sm:$0xff]
        %v1954 = vld [vmem:[#allocation3 + $0x18] sm:$0xff]
        %v1955 = vld [vmem:[#allocation13] sm:$0xff]
        %v1956 = vld [vmem:[#allocation13 + $0x8] sm:$0xff]
        %v1957 = vld [vmem:[#allocation13 + $0x10] sm:$0xff]
        %v1958 = vld [vmem:[#allocation13 + $0x18] sm:$0xff]
        %v1959 = vld [vmem:[#allocation13 + $0x20] sm:$0xff]
        %v1960 = vld [vmem:[#allocation13 + $0x28] sm:$0xff]
        %v1961 = vld [vmem:[#allocation13 + $0x30] sm:$0xff]
        %v1962 = vld [vmem:[#allocation13 + $0x38] sm:$0xff]
        %v1963 = vld [vmem:[#allocation13 + $0x40] sm:$0xff]
        %v1964 = vld [vmem:[#allocation13 + $0x48] sm:$0xff]
        %v1965 = vld [vmem:[#allocation13 + $0x50] sm:$0xff]
        %v1966 = vld [vmem:[#allocation13 + $0x58] sm:$0xff]
        %v1967 = vld [vmem:[#allocation13 + $0x60] sm:$0xff]
        %v1968 = vld [vmem:[#allocation13 + $0x68] sm:$0xff]
        %v1969 = vld [vmem:[#allocation13 + $0x70] sm:$0xff]
        %v1970 = vld [vmem:[#allocation13 + $0x78] sm:$0xff]
        %v1971 = vld [vmem:[#allocation13 + $0x80] sm:$0xff]
        %v1972 = vld [vmem:[#allocation13 + $0x88] sm:$0xff]
        %v1973 = vld [vmem:[#allocation13 + $0x90] sm:$0xff]
        %v1974 = vld [vmem:[#allocation13 + $0x98] sm:$0xff]
        %v1975 = vld [vmem:[#allocation13 + $0xa0] sm:$0xff]
        %v1976 = vld [vmem:[#allocation13 + $0xa8] sm:$0xff]
        %v1977 = vld [vmem:[#allocation13 + $0xb0] sm:$0xff]
        %v1978 = vld [vmem:[#allocation13 + $0xb8] sm:$0xff]
        %v1979 = vld [vmem:[#allocation13 + $0xc0] sm:$0xff]
        %v1980 = vld [vmem:[#allocation13 + $0xc8] sm:$0xff]
        %v1981 = vld [vmem:[#allocation13 + $0xd0] sm:$0xff]
        %v1982 = vld [vmem:[#allocation13 + $0xd8] sm:$0xff]
        %v1983 = vld [vmem:[#allocation13 + $0xe0] sm:$0xff]
        %v1984 = vld [vmem:[#allocation13 + $0xe8] sm:$0xff]
        %v1985 = vld [vmem:[#allocation13 + $0xf0] sm:$0xff]
        %v1986 = vld [vmem:[#allocation13 + $0xf8] sm:$0xff]
        %v1987 = vld [vmem:[#allocation13 + $0x100] sm:$0xff]
        %v1988 = vld [vmem:[#allocation13 + $0x108] sm:$0xff]
        %v1989 = vld [vmem:[#allocation13 + $0x110] sm:$0xff]
        %v1990 = vld [vmem:[#allocation13 + $0x118] sm:$0xff]
        %v1991 = vld [vmem:[#allocation13 + $0x120] sm:$0xff]
        %v1992 = vld [vmem:[#allocation13 + $0x128] sm:$0xff]
        %v1993 = vld [vmem:[#allocation13 + $0x130] sm:$0xff]
        %v1994 = vld [vmem:[#allocation13 + $0x138] sm:$0xff]
        %v1995 = vld [vmem:[#allocation13 + $0x140] sm:$0xff]
        %v1996 = vld [vmem:[#allocation13 + $0x148] sm:$0xff]
        %v1997 = vld [vmem:[#allocation13 + $0x150] sm:$0xff]
        %v1998 = vld [vmem:[#allocation13 + $0x158] sm:$0xff]
        %v1999 = vld [vmem:[#allocation13 + $0x160] sm:$0xff]
        %v2000 = vld [vmem:[#allocation13 + $0x168] sm:$0xff]
        %v2001 = vld [vmem:[#allocation13 + $0x170] sm:$0xff]
        %v2002 = vld [vmem:[#allocation13 + $0x178] sm:$0xff]
        %v2003 = vld [vmem:[#allocation13 + $0x180] sm:$0xff]
        %v2004 = vld [vmem:[#allocation13 + $0x188] sm:$0xff]
        %v2005 = vld [vmem:[#allocation13 + $0x190] sm:$0xff]
        %v2006 = vld [vmem:[#allocation13 + $0x198] sm:$0xff]
        %v2007 = vld [vmem:[#allocation13 + $0x1a0] sm:$0xff]
        %v2008 = vld [vmem:[#allocation13 + $0x1a8] sm:$0xff]
        %v2009 = vld [vmem:[#allocation13 + $0x1b0] sm:$0xff]
        %v2010 = vld [vmem:[#allocation13 + $0x1b8] sm:$0xff]
        %v2011 = vld [vmem:[#allocation13 + $0x1c0] sm:$0xff]
        %v2012 = vld [vmem:[#allocation13 + $0x1c8] sm:$0xff]
        %v2013 = vld [vmem:[#allocation13 + $0x1d0] sm:$0xff]
        %v2014 = vld [vmem:[#allocation13 + $0x1d8] sm:$0xff]
        %v2015 = vld [vmem:[#allocation13 + $0x1e0] sm:$0xff]
        %v2016 = vld [vmem:[#allocation13 + $0x1e8] sm:$0xff]
        %v2017 = vld [vmem:[#allocation13 + $0x1f0] sm:$0xff]
        %v2018 = vld [vmem:[#allocation13 + $0x1f8] sm:$0xff]
        %v2019 = vld [vmem:[#allocation15] sm:$0x1]
        %v2021 = vlaneseq
        %v2022 = vshrl.u32 %v2021, 7
        %v2023 = vsub.s32 0, %v2022
        %v2024 = vrot.slane %v2019, %v2023
        %2026 = vmatprep.subr.mxu0 0.0
        %2027 = vmatpush1.msra.mxu0 %v1955
        %2028 = vmatprep.subr.mxu0 0.0
        %2029 = vmatpush1.msra.mxu0 %v1956
        %2030 = vmatprep.subr.mxu0 0.0
        %2031 = vmatpush1.msra.mxu0 %v1957
        %2032 = vmatprep.subr.mxu0 0.0
        %2033 = vmatpush1.msra.mxu0 %v1958
        %2034 = vmatprep.subr.mxu0 0.0
        %2035 = vmatpush1.msra.mxu0 %v1959
        %2036 = vmatprep.subr.mxu0 0.0
        %2037 = vmatpush1.msra.mxu0 %v1960
        %2038 = vmatprep.subr.mxu0 0.0
        %2039 = vmatpush1.msra.mxu0 %v1961
        %2040 = vmatprep.subr.mxu0 0.0
        %2041 = vmatpush1.msra.mxu0 %v1962
        %2042 = vmatprep.subr.mxu0 0.0
        %2043 = vmatpush1.msra.mxu0 %v1963
        %2044 = vmatprep.subr.mxu0 0.0
        %2045 = vmatpush1.msra.mxu0 %v1964
        %2046 = vmatprep.subr.mxu0 0.0
        %2047 = vmatpush1.msra.mxu0 %v1965
        %2048 = vmatprep.subr.mxu0 0.0
        %2049 = vmatpush1.msra.mxu0 %v1966
        %2050 = vmatprep.subr.mxu0 0.0
        %2051 = vmatpush1.msra.mxu0 %v1967
        %2052 = vmatprep.subr.mxu0 0.0
        %2053 = vmatpush1.msra.mxu0 %v1968
        %2054 = vmatprep.subr.mxu0 0.0
        %2055 = vmatpush1.msra.mxu0 %v1969
        %2056 = vmatprep.subr.mxu0 0.0
        %2057 = vmatpush1.msra.mxu0 %v1970
        %2058 = vmatprep.subr.mxu0 0.0
        %2059 = vmatpush1.msra.mxu0 %v1971
        %2060 = vmatprep.subr.mxu0 0.0
        %2061 = vmatpush1.msra.mxu0 %v1972
        %2062 = vmatprep.subr.mxu0 0.0
        %2063 = vmatpush1.msra.mxu0 %v1973
        %2064 = vmatprep.subr.mxu0 0.0
        %2065 = vmatpush1.msra.mxu0 %v1974
        %2066 = vmatprep.subr.mxu0 0.0
        %2067 = vmatpush1.msra.mxu0 %v1975
        %2068 = vmatprep.subr.mxu0 0.0
        %2069 = vmatpush1.msra.mxu0 %v1976
        %2070 = vmatprep.subr.mxu0 0.0
        %2071 = vmatpush1.msra.mxu0 %v1977
        %2072 = vmatprep.subr.mxu0 0.0
        %2073 = vmatpush1.msra.mxu0 %v1978
        %2074 = vmatprep.subr.mxu0 0.0
        %2075 = vmatpush1.msra.mxu0 %v1979
        %2076 = vmatprep.subr.mxu0 0.0
        %2077 = vmatpush1.msra.mxu0 %v1980
        %2078 = vmatprep.subr.mxu0 0.0
        %2079 = vmatpush1.msra.mxu0 %v1981
        %2080 = vmatprep.subr.mxu0 0.0
        %2081 = vmatpush1.msra.mxu0 %v1982
        %2082 = vmatprep.subr.mxu0 0.0
        %2083 = vmatpush1.msra.mxu0 %v1983
        %2084 = vmatprep.subr.mxu0 0.0
        %2085 = vmatpush1.msra.mxu0 %v1984
        %2086 = vmatprep.subr.mxu0 0.0
        %2087 = vmatpush1.msra.mxu0 %v1985
        %2088 = vmatprep.subr.mxu0 0.0
        %2089 = vmatpush1.msra.mxu0 %v1986
        %2090 = vmatprep.mubr.f32.mxu0 %v1952
        %2091 = vmatmul.mubr.f32.gmra.mrb[0].mxu0 %v1951
        %v2092 = vpop.f32.mrb[0].mxu0
        %v2093 = vadd.f32 %v2024, %v2092
        %v2094 = vpop.f32.mrb[0].mxu0
        %2095 = vdwg.mxu0
        %2096 = vmatprep.subr.mxu0 0.0
        %2097 = vmatpush1.msra.mxu0 %v1987
        %2098 = vmatprep.subr.mxu0 0.0
        %2099 = vmatpush1.msra.mxu0 %v1988
        %2100 = vmatprep.subr.mxu0 0.0
        %2101 = vmatpush1.msra.mxu0 %v1989
        %2102 = vmatprep.subr.mxu0 0.0
        %2103 = vmatpush1.msra.mxu0 %v1990
        %2104 = vmatprep.subr.mxu0 0.0
        %2105 = vmatpush1.msra.mxu0 %v1991
        %2106 = vmatprep.subr.mxu0 0.0
        %2107 = vmatpush1.msra.mxu0 %v1992
        %2108 = vmatprep.subr.mxu0 0.0
        %2109 = vmatpush1.msra.mxu0 %v1993
        %2110 = vmatprep.subr.mxu0 0.0
        %2111 = vmatpush1.msra.mxu0 %v1994
        %2112 = vmatprep.subr.mxu0 0.0
        %2113 = vmatpush1.msra.mxu0 %v1995
        %2114 = vmatprep.subr.mxu0 0.0
        %2115 = vmatpush1.msra.mxu0 %v1996
        %2116 = vmatprep.subr.mxu0 0.0
        %2117 = vmatpush1.msra.mxu0 %v1997
        %2118 = vmatprep.subr.mxu0 0.0
        %2119 = vmatpush1.msra.mxu0 %v1998
        %2120 = vmatprep.subr.mxu0 0.0
        %2121 = vmatpush1.msra.mxu0 %v1999
        %2122 = vmatprep.subr.mxu0 0.0
        %2123 = vmatpush1.msra.mxu0 %v2000
        %2124 = vmatprep.subr.mxu0 0.0
        %2125 = vmatpush1.msra.mxu0 %v2001
        %2126 = vmatprep.subr.mxu0 0.0
        %2127 = vmatpush1.msra.mxu0 %v2002
        %2128 = vmatprep.subr.mxu0 0.0
        %2129 = vmatpush1.msra.mxu0 %v2003
        %2130 = vmatprep.subr.mxu0 0.0
        %2131 = vmatpush1.msra.mxu0 %v2004
        %2132 = vmatprep.subr.mxu0 0.0
        %2133 = vmatpush1.msra.mxu0 %v2005
        %2134 = vmatprep.subr.mxu0 0.0
        %2135 = vmatpush1.msra.mxu0 %v2006
        %2136 = vmatprep.subr.mxu0 0.0
        %2137 = vmatpush1.msra.mxu0 %v2007
        %2138 = vmatprep.subr.mxu0 0.0
        %2139 = vmatpush1.msra.mxu0 %v2008
        %2140 = vmatprep.subr.mxu0 0.0
        %2141 = vmatpush1.msra.mxu0 %v2009
        %2142 = vmatprep.subr.mxu0 0.0
        %2143 = vmatpush1.msra.mxu0 %v2010
        %2144 = vmatprep.subr.mxu0 0.0
        %2145 = vmatpush1.msra.mxu0 %v2011
        %2146 = vmatprep.subr.mxu0 0.0
        %2147 = vmatpush1.msra.mxu0 %v2012
        %2148 = vmatprep.subr.mxu0 0.0
        %2149 = vmatpush1.msra.mxu0 %v2013
        %2150 = vmatprep.subr.mxu0 0.0
        %2151 = vmatpush1.msra.mxu0 %v2014
        %2152 = vmatprep.subr.mxu0 0.0
        %2153 = vmatpush1.msra.mxu0 %v2015
        %2154 = vmatprep.subr.mxu0 0.0
        %2155 = vmatpush1.msra.mxu0 %v2016
        %2156 = vmatprep.subr.mxu0 0.0
        %2157 = vmatpush1.msra.mxu0 %v2017
        %2158 = vmatprep.subr.mxu0 0.0
        %2159 = vmatpush1.msra.mxu0 %v2018
        %2160 = vmatprep.mubr.f32.mxu0 %v1954
        %2161 = vmatmul.mubr.f32.gmra.mrb[0].mxu0 %v1953
        %v2162 = vpop.f32.mrb[0].mxu0
        %v2163 = vadd.f32 %v2093, %v2162
        %v2164 = vpop.f32.mrb[0].mxu0
        %2165 = vdwg.mxu0
        %v2166 = vmax.f32 %v2163, 0.0
        %2167 = vst [vmem:[%s375] sm:$0xff] %v2166
        %s2168 = sand.u32 %s187, 1
        %s2169 = scalar_lea.sflag [#allocation6], %s2168
        %s2170 = sand.u32 %s187, 1
        %s2171 = smul.addr %s2170, 8
        %s2172 = scalar_lea.vmem [#allocation16], %s2171
        // Predicated region
        $region77: #{tpu_custom_call.1} parent=47 // pred_check
          %p2173 = pneg %p197
        $region78: #{tpu_custom_call.1} parent=47 // pred_check_branch
          %2175 = sbr.rel (%p2173) target = $region80
        $region79: #{tpu_custom_call.1} parent=47 // pred_region
          %s2177 = ssub.s32 128, 128
          %2178 = vsyncadd %s2169, %s2177
          %s2179 = smul.addr %s27, 128
          %s2180 = scalar_lea.hbm %s7, %s2179
          %s2182 = sshll.u32 %s2172, 4
          %s2183 = int_to_ptr.vmem [resolvable:$true] %s2182
          %2185 = dma.vmem_to_hbm [thread:$0]  %s2183, 128, %s2180, %s2169
        $region80: #{tpu_custom_call.1} parent=47 // pred_fallthru
          _
      $region48: #{tpu_custom_call.1} parent=5 // pred_fallthru
        _
      %p2186 = scmp.le.s32.totalorder 2, %s22
      // Predicated region
      $region81: #{tpu_custom_call.1} parent=5 // pred_check
        %p2187 = pneg %p2186
      $region82: #{tpu_custom_call.1} parent=5 // pred_check_branch
        %2189 = sbr.rel (%p2187) target = $region84
      $region83: #{tpu_custom_call.1} parent=5 // pred_region
        %s2190 = ssub.s32 %s22, 2
        // Predicated region
        $region85: #{tpu_custom_call.1} parent=83 // pred_check
          %p2191 = pneg %p203
        $region86: #{tpu_custom_call.1} parent=83 // pred_check_branch
          %2193 = sbr.rel (%p2191) target = $region88
        $region87: #{tpu_custom_call.1} parent=83 // pred_region
          %s2194 = sand.u32 %s188, 1
          %s2195 = scalar_lea.sflag [#allocation6], %s2194
          %s2196 = sand.u32 %s188, 1
          %s2197 = smul.addr %s2196, 8
          %s2198 = scalar_lea.vmem [#allocation16], %s2197
          %2199 = dma.done %s2195, 128
        $region88: #{tpu_custom_call.1} parent=83 // pred_fallthru
          _
      $region84: #{tpu_custom_call.1} parent=5 // pred_fallthru
        _
    $region6: #{tpu_custom_call.1} parent=1 // loop_footer
      %s26 = sadd.s32 1, %s22
    $region7: #{tpu_custom_call.1} parent=1 // loop_footer_branch
      %21 = sbr.rel target = $region3
    $region8: #{tpu_custom_call.1} parent=1 // loop_exit
      _
    %2200 = vsyncpa [#allocation5], 1
    %s2201 = scalar_lea.sflag [#allocation5], 1
    %2202 = vsyncpa %s2201, 1
    %2203 = vsyncpa [#allocation8], 1
    %2204 = vsyncpa [#allocation11], 1
    %2205 = vsyncpa [#allocation14], 1
    %2206 = vsyncpa [#allocation6], 1
    %s2207 = scalar_lea.sflag [#allocation6], 1
    %2208 = vsyncpa %s2207, 1

</llo_original>
